<compile_context>
chip_gen: v7x
topology: tpu7x:2x2x1
jax: 0.10.0
libtpu: 0.0.40
codegen_flags: <defaults>
</compile_context>

<pallas_src>
from functools import partial

import jax
import jax.numpy as jnp
from jax.experimental import pallas as pl
from jax.experimental.pallas import tpu as pltpu


# -----------------------------------------------------------------------------
# Fused kernel
# -----------------------------------------------------------------------------
def _obfuscator_kernel(tok_ref, embp_ref, wstep_ref, wvpad_ref, bv_ref,
                       wlen_ref, bl_ref, out_ref, gi_ref, h_ref,
                       *, T, B, Bp, L, H, S):
    f32 = jnp.float32
    n_rows = (T + 1) * Bp
    vocab_in = embp_ref.shape[0]

    # ---- fused embedding lookup + hoisted encoder input projection (+ biases) ----
    # one-hot matmul; emb_proj already contains emb @ Wx + b_step per vocab row.
    tok = tok_ref[...]                                               # (n_rows, 1) i32
    col = jax.lax.broadcasted_iota(jnp.int32, (n_rows, vocab_in), 1)
    onehot = (col == tok).astype(f32)                                # (n_rows, vocab)
    gi_ref[...] = jnp.dot(onehot, embp_ref[...], preferred_element_type=f32)

    wstep = wstep_ref[...]                                           # (S, 4S)

    # lane mask keeping only the encoder half of the packed state (used once)
    lane = jax.lax.broadcasted_iota(jnp.int32, (Bp, S), 1)
    enc_mask = (lane < H).astype(f32)

    # ---- interleaved encoder/decoder recurrence as one packed GRU cell ----------
    # packed state at iteration i:  hcat = [h_enc(i-1) | h_dec(i-2)]   (Bp, S)
    hcat = jnp.zeros((Bp, S), f32)
    for i in range(T + 1):                         # T is small: full unroll
        g = jnp.dot(hcat, wstep, preferred_element_type=f32) \
            + gi_ref[pl.ds(i * Bp, Bp), :]                           # (Bp, 4S)
        rz = jax.nn.sigmoid(g[:, :2 * S])          # [r_enc|r_dec | z_enc|z_dec]
        r = rz[:, :S]                              # aligned full-vreg slice
        z = rz[:, S:2 * S]
        n = jnp.tanh(g[:, 3 * S:4 * S] + r * g[:, 2 * S:3 * S])
        hcat = (1.0 - z) * n + z * hcat            # -> [h_enc(i) | h_dec(i-1)]
        if i == 0:
            hcat = hcat * enc_mask                 # decoder initial hidden = 0
        else:
            h_ref[pl.ds((i - 1) * Bp, Bp), :] = hcat   # aligned (Bp, S) store

    # ---- fused output projections -----------------------------------------------
    # vocab: one matmul over all timesteps/batch rows (enc half zeroed by wv_pad)
    pv = jnp.dot(h_ref[...], wvpad_ref[...], preferred_element_type=f32) \
        + bv_ref[...]                                                # (T*Bp, V)
    # length: expanded weight already selects the real batch rows + mixes time
    outm = jnp.dot(wlen_ref[...], pv, preferred_element_type=f32)    # (B*L, V)
    bl = bl_ref[...]                                                 # (L, 1)
    for b in range(B):
        out_ref[b] = outm[b * L:(b + 1) * L, :] + bl                 # (L, V)


# -----------------------------------------------------------------------------
# Wrapper: packs weights into the fused layouts and launches the kernel.
# -----------------------------------------------------------------------------
def obfuscator_forward(tokens, params):
    """tokens: (B, T) int32 -> logits (B, L, V) float32."""
    B, T = tokens.shape
    emb = params["emb"]
    enc_wih, enc_whh = params["enc_wih"], params["enc_whh"]
    enc_bih, enc_bhh = params["enc_bih"], params["enc_bhh"]
    dec_wih, dec_whh = params["dec_wih"], params["dec_whh"]
    dec_bih, dec_bhh = params["dec_bih"], params["dec_bhh"]
    wv_t, bv = params["wv_t"], params["bv"]
    wl, bl = params["wl"], params["bl"]

    E = emb.shape[1]
    H = enc_whh.shape[0]
    V = wv_t.shape[1]
    L = wl.shape[0]
    S = H + E                          # packed hidden width (128 for 64/64)
    W4 = 4 * S
    Bp = max(8, ((B + 7) // 8) * 8)    # batch padded to a sublane tile
    f32 = jnp.float32

    # --- tokens: time-major, batch padded, plus one dummy pipeline-drain step ----
    tok_pad = jnp.zeros((T + 1, Bp), jnp.int32).at[:T, :B].set(
        tokens.T.astype(jnp.int32))
    tok_flat = tok_pad.reshape((T + 1) * Bp, 1)

    # --- packed per-step weight: rows [h_enc | h_dec], cols 4 aligned gate blocks
    #     [0:S)  r   | [S:2S) z  | [2S:3S) n_hh-part | [3S:4S) n_ih-part
    #     each block split [enc(H) | dec(E)]
    Wstep = jnp.zeros((S, W4), f32)
    Wstep = Wstep.at[0:H, 0 * S:0 * S + H].set(enc_whh[:, 0:H])          # enc r (hh)
    Wstep = Wstep.at[0:H, 0 * S + H:1 * S].set(dec_wih[:, 0:E])          # dec r (ih)
    Wstep = Wstep.at[H:S, 0 * S + H:1 * S].set(dec_whh[:, 0:E])          # dec r (hh)
    Wstep = Wstep.at[0:H, 1 * S:1 * S + H].set(enc_whh[:, H:2 * H])      # enc z (hh)
    Wstep = Wstep.at[0:H, 1 * S + H:2 * S].set(dec_wih[:, E:2 * E])      # dec z (ih)
    Wstep = Wstep.at[H:S, 1 * S + H:2 * S].set(dec_whh[:, E:2 * E])      # dec z (hh)
    Wstep = Wstep.at[0:H, 2 * S:2 * S + H].set(enc_whh[:, 2 * H:3 * H])  # enc n (hh)
    Wstep = Wstep.at[H:S, 2 * S + H:3 * S].set(dec_whh[:, 2 * E:3 * E])  # dec n (hh)
    Wstep = Wstep.at[0:H, 3 * S + H:4 * S].set(dec_wih[:, 2 * E:3 * E])  # dec n (ih)

    # --- embedding fused with hoisted encoder input projection and ALL biases ----
    Wx = jnp.zeros((E, W4), f32)
    Wx = Wx.at[:, 0 * S:0 * S + H].set(enc_wih[:, 0:H])
    Wx = Wx.at[:, 1 * S:1 * S + H].set(enc_wih[:, H:2 * H])
    Wx = Wx.at[:, 3 * S:3 * S + H].set(enc_wih[:, 2 * H:3 * H])
    bstep = jnp.zeros((1, W4), f32)
    bstep = bstep.at[:, 0 * S:0 * S + H].set(enc_bih[:, 0:H] + enc_bhh[:, 0:H])
    bstep = bstep.at[:, 0 * S + H:1 * S].set(dec_bih[:, 0:E] + dec_bhh[:, 0:E])
    bstep = bstep.at[:, 1 * S:1 * S + H].set(enc_bih[:, H:2 * H] + enc_bhh[:, H:2 * H])
    bstep = bstep.at[:, 1 * S + H:2 * S].set(dec_bih[:, E:2 * E] + dec_bhh[:, E:2 * E])
    bstep = bstep.at[:, 2 * S:2 * S + H].set(enc_bhh[:, 2 * H:3 * H])
    bstep = bstep.at[:, 2 * S + H:3 * S].set(dec_bhh[:, 2 * E:3 * E])
    bstep = bstep.at[:, 3 * S:3 * S + H].set(enc_bih[:, 2 * H:3 * H])
    bstep = bstep.at[:, 3 * S + H:4 * S].set(dec_bih[:, 2 * E:3 * E])
    emb_proj = emb @ Wx + bstep        # (vocab_in, 4S); one-hot rows sum to 1

    # --- vocab projection padded so it reads the packed state directly -----------
    wv_pad = jnp.zeros((S, V), f32).at[H:S, :].set(wv_t)

    # --- length projection expanded over (time x padded-batch) packed rows -------
    eyeB = jnp.eye(Bp, dtype=f32)[:B]                                  # (B, Bp)
    wlen = jnp.einsum("lt,bp->bltp", wl, eyeB).reshape(B * L, T * Bp)

    vmem = pl.BlockSpec(memory_space=pltpu.MemorySpace.VMEM)
    kernel = partial(_obfuscator_kernel, T=T, B=B, Bp=Bp, L=L, H=H, S=S)
    return pl.pallas_call(
        kernel,
        out_shape=jax.ShapeDtypeStruct((B, L, V), f32),
        in_specs=[vmem] * 7,
        out_specs=vmem,
        scratch_shapes=[
            pltpu.VMEM(((T + 1) * Bp, W4), f32),   # hoisted gate pre-activations
            pltpu.VMEM((T * Bp, S), f32),          # packed hidden states per step
        ],
    )(tok_flat, emb_proj, Wstep, wv_pad, bv, wlen, bl)


# -----------------------------------------------------------------------------
# Pure-JAX reference (same math, same parameter layout) for correctness check.
# -----------------------------------------------------------------------------
def reference_forward(tokens, params):
    emb = jnp.take(params["emb"], tokens, axis=0)                     # (B, T, E)

    def gru(x, wih, whh, bih, bhh):
        Bb, Tt, _ = x.shape
        Hh = whh.shape[0]
        h = jnp.zeros((Bb, Hh), jnp.float32)
        outs = []
        for t in range(Tt):
            gi = x[:, t, :] @ wih + bih
            gh = h @ whh + bhh
            r = jax.nn.sigmoid(gi[:, :Hh] + gh[:, :Hh])
            z = jax.nn.sigmoid(gi[:, Hh:2 * Hh] + gh[:, Hh:2 * Hh])
            n = jnp.tanh(gi[:, 2 * Hh:] + r * gh[:, 2 * Hh:])
            h = (1.0 - z) * n + z * h
            outs.append(h)
        return jnp.stack(outs, axis=1)                                # (B, T, H)

    enc = gru(emb, params["enc_wih"], params["enc_whh"],
              params["enc_bih"], params["enc_bhh"])
    dec = gru(enc, params["dec_wih"], params["dec_whh"],
              params["dec_bih"], params["dec_bhh"])
    pv = dec @ params["wv_t"] + params["bv"]                          # (B, T, V)
    out = jnp.einsum("lt,btv->blv", params["wl"], pv) \
        + params["bl"].reshape(1, -1, 1)                              # (B, L, V)
    return out


# -----------------------------------------------------------------------------
# Parameter init (gates concatenated along the last dim in torch order r, z, n).
# -----------------------------------------------------------------------------
def init_params(key, input_vocab, output_vocab, embed_dim, hidden_dim,
                input_len, output_len):
    ks = jax.random.split(key, 13)
    s = 0.1
    n = lambda k, shape: s * jax.random.normal(k, shape, jnp.float32)
    return {
        "emb":     n(ks[0], (input_vocab, embed_dim)),
        # encoder GRU: embed_dim -> hidden_dim, columns [r | z | n]
        "enc_wih": n(ks[1], (embed_dim, 3 * hidden_dim)),
        "enc_whh": n(ks[2], (hidden_dim, 3 * hidden_dim)),
        "enc_bih": n(ks[3], (1, 3 * hidden_dim)),
        "enc_bhh": n(ks[4], (1, 3 * hidden_dim)),
        # decoder GRU: hidden_dim -> embed_dim
        "dec_wih": n(ks[5], (hidden_dim, 3 * embed_dim)),
        "dec_whh": n(ks[6], (embed_dim, 3 * embed_dim)),
        "dec_bih": n(ks[7], (1, 3 * embed_dim)),
        "dec_bhh": n(ks[8], (1, 3 * embed_dim)),
        # projection_out_vocab: Linear(embed_dim, output_vocab) (weight pre-transposed)
        "wv_t":    n(ks[9], (embed_dim, output_vocab)),
        "bv":      n(ks[10], (1, output_vocab)),
        # projection_out_len: Linear(input_len, output_len)
        "wl":      n(ks[11], (output_len, input_len)),
        "bl":      n(ks[12], (output_len, 1)),
    }


if __name__ == "__main__":
    input_vocab_size = 32
    output_vocab_size = 16
    embed_dim = 64
    hidden_dim = 64
    input_len = 8        # T
    output_length = 12   # L
    batch = 2

    key = jax.random.PRNGKey(0)
    k_tok, k_par = jax.random.split(key)
    tokens = jax.random.randint(k_tok, (batch, input_len), 0, input_vocab_size,
                                dtype=jnp.int32)
    params = init_params(k_par, input_vocab_size, output_vocab_size,
                         embed_dim, hidden_dim, input_len, output_length)

    logits = jax.jit(obfuscator_forward)(tokens, params)
    logits = jax.block_until_ready(logits)
    assert logits.shape == (batch, output_length, output_vocab_size)

    ref = reference_forward(tokens, params)
    assert bool(jnp.allclose(logits, ref, atol=1e-3, rtol=1e-3)), \
        "Pallas kernel does not match pure-JAX reference"

    print("KERNEL_OK")
</pallas_src>

<mosaic_0001>
module attributes {stable_mosaic.version = 11 : i64} {
  func.func @_obfuscator_kernel(%arg0: memref<72x1xi32, #tpu.memory_space<vmem>>, %arg1: memref<32x512xf32, #tpu.memory_space<vmem>>, %arg2: memref<128x512xf32, #tpu.memory_space<vmem>>, %arg3: memref<128x16xf32, #tpu.memory_space<vmem>>, %arg4: memref<1x16xf32, #tpu.memory_space<vmem>>, %arg5: memref<24x64xf32, #tpu.memory_space<vmem>>, %arg6: memref<12x1xf32, #tpu.memory_space<vmem>>, %arg7: memref<2x12x16xf32, #tpu.memory_space<vmem>>, %arg8: memref<72x512xf32, #tpu.memory_space<vmem>>, %arg9: memref<64x128xf32, #tpu.memory_space<vmem>>) attributes {dimension_semantics = [], scalar_prefetch = 0 : i64, scratch_operands = 2 : i64, tpu.core_type = #tpu.core_type<tc>} {
    %c0 = arith.constant 0 : index
    %c0_0 = arith.constant 0 : index
    %0 = vector.load %arg0[%c0, %c0_0] : memref<72x1xi32, #tpu.memory_space<vmem>>, vector<72x1xi32>
    %1 = tpu.iota {dimensions = array<i32: 1>} : vector<72x32xi32>
    %2 = vector.broadcast %0 : vector<72x1xi32> to vector<72x32xi32>
    %3 = arith.cmpi eq, %1, %2 : vector<72x32xi32>
    %4 = arith.extui %3 : vector<72x32xi1> to vector<72x32xi32>
    %5 = arith.sitofp %4 : vector<72x32xi32> to vector<72x32xf32>
    %c0_1 = arith.constant 0 : index
    %c0_2 = arith.constant 0 : index
    %6 = vector.load %arg1[%c0_1, %c0_2] : memref<32x512xf32, #tpu.memory_space<vmem>>, vector<32x512xf32>
    %cst = arith.constant dense<0.000000e+00> : vector<72x512xf32>
    %7 = tpu.matmul %5, %6, %cst {dimension_numbers = #tpu.dot_dimension_numbers<[1], [0], [0], [1], [0, 0, 1, 1], [], []>} : vector<72x32xf32>, vector<32x512xf32>, vector<72x512xf32> -> vector<72x512xf32>
    %c0_3 = arith.constant 0 : index
    %c0_4 = arith.constant 0 : index
    %8 = vector.load %arg8[%c0_3, %c0_4] : memref<72x512xf32, #tpu.memory_space<vmem>>, vector<72x512xf32>
    tpu.vector_store %arg8[%c0_3, %c0_4], %7 {strides = array<i32>} : memref<72x512xf32, #tpu.memory_space<vmem>>, vector<72x512xf32>,
    %c0_5 = arith.constant 0 : index
    %c0_6 = arith.constant 0 : index
    %9 = vector.load %arg2[%c0_5, %c0_6] : memref<128x512xf32, #tpu.memory_space<vmem>>, vector<128x512xf32>
    %10 = tpu.iota {dimensions = array<i32: 1>} : vector<8x128xi32>
    %c64_i32 = arith.constant 64 : i32
    %11 = vector.broadcast %c64_i32 : i32 to vector<8x128xi32>
    %12 = arith.cmpi slt, %10, %11 : vector<8x128xi32>
    %13 = arith.extui %12 : vector<8x128xi1> to vector<8x128xi32>
    %14 = arith.sitofp %13 : vector<8x128xi32> to vector<8x128xf32>
    %cst_7 = arith.constant 0.000000e+00 : f32
    %15 = vector.broadcast %cst_7 : f32 to vector<8x128xf32>
    %cst_8 = arith.constant dense<0.000000e+00> : vector<8x512xf32>
    %16 = tpu.matmul %15, %9, %cst_8 {dimension_numbers = #tpu.dot_dimension_numbers<[1], [0], [0], [1], [0, 0, 1, 1], [], []>} : vector<8x128xf32>, vector<128x512xf32>, vector<8x512xf32> -> vector<8x512xf32>
    %c0_9 = arith.constant 0 : index
    %c0_10 = arith.constant 0 : index
    %17 = vector.load %arg8[%c0_9, %c0_10] : memref<72x512xf32, #tpu.memory_space<vmem>>, vector<8x512xf32>
    %18 = arith.addf %16, %17 : vector<8x512xf32>
    %19 = vector.extract_strided_slice %18 {offsets = [0, 0], sizes = [8, 256], strides = [1, 1]} : vector<8x512xf32> to vector<8x256xf32>
    %20 = arith.negf %19 : vector<8x256xf32>
    %21 = math.exp %20 : vector<8x256xf32>
    %cst_11 = arith.constant 1.000000e+00 : f32
    %22 = vector.broadcast %cst_11 : f32 to vector<8x256xf32>
    %23 = arith.addf %22, %21 : vector<8x256xf32>
    %24 = arith.divf %22, %23 : vector<8x256xf32>
    %25 = vector.extract_strided_slice %24 {offsets = [0, 0], sizes = [8, 128], strides = [1, 1]} : vector<8x256xf32> to vector<8x128xf32>
    %26 = vector.extract_strided_slice %24 {offsets = [0, 128], sizes = [8, 128], strides = [1, 1]} : vector<8x256xf32> to vector<8x128xf32>
    %27 = vector.extract_strided_slice %18 {offsets = [0, 384], sizes = [8, 128], strides = [1, 1]} : vector<8x512xf32> to vector<8x128xf32>
    %28 = vector.extract_strided_slice %18 {offsets = [0, 256], sizes = [8, 128], strides = [1, 1]} : vector<8x512xf32> to vector<8x128xf32>
    %29 = arith.mulf %25, %28 : vector<8x128xf32>
    %30 = arith.addf %27, %29 : vector<8x128xf32>
    %31 = math.tanh %30 : vector<8x128xf32>
    %cst_12 = arith.constant 1.000000e+00 : f32
    %32 = vector.broadcast %cst_12 : f32 to vector<8x128xf32>
    %33 = arith.subf %32, %26 : vector<8x128xf32>
    %34 = arith.mulf %33, %31 : vector<8x128xf32>
    %35 = arith.mulf %26, %15 : vector<8x128xf32>
    %36 = arith.addf %34, %35 : vector<8x128xf32>
    %37 = arith.mulf %36, %14 : vector<8x128xf32>
    %cst_13 = arith.constant dense<0.000000e+00> : vector<8x512xf32>
    %38 = tpu.matmul %37, %9, %cst_13 {dimension_numbers = #tpu.dot_dimension_numbers<[1], [0], [0], [1], [0, 0, 1, 1], [], []>} : vector<8x128xf32>, vector<128x512xf32>, vector<8x512xf32> -> vector<8x512xf32>
    %c8 = arith.constant 8 : index
    %c0_14 = arith.constant 0 : index
    %39 = vector.load %arg8[%c8, %c0_14] : memref<72x512xf32, #tpu.memory_space<vmem>>, vector<8x512xf32>
    %40 = arith.addf %38, %39 : vector<8x512xf32>
    %41 = vector.extract_strided_slice %40 {offsets = [0, 0], sizes = [8, 256], strides = [1, 1]} : vector<8x512xf32> to vector<8x256xf32>
    %42 = arith.negf %41 : vector<8x256xf32>
    %43 = math.exp %42 : vector<8x256xf32>
    %cst_15 = arith.constant 1.000000e+00 : f32
    %44 = vector.broadcast %cst_15 : f32 to vector<8x256xf32>
    %45 = arith.addf %44, %43 : vector<8x256xf32>
    %46 = arith.divf %44, %45 : vector<8x256xf32>
    %47 = vector.extract_strided_slice %46 {offsets = [0, 0], sizes = [8, 128], strides = [1, 1]} : vector<8x256xf32> to vector<8x128xf32>
    %48 = vector.extract_strided_slice %46 {offsets = [0, 128], sizes = [8, 128], strides = [1, 1]} : vector<8x256xf32> to vector<8x128xf32>
    %49 = vector.extract_strided_slice %40 {offsets = [0, 384], sizes = [8, 128], strides = [1, 1]} : vector<8x512xf32> to vector<8x128xf32>
    %50 = vector.extract_strided_slice %40 {offsets = [0, 256], sizes = [8, 128], strides = [1, 1]} : vector<8x512xf32> to vector<8x128xf32>
    %51 = arith.mulf %47, %50 : vector<8x128xf32>
    %52 = arith.addf %49, %51 : vector<8x128xf32>
    %53 = math.tanh %52 : vector<8x128xf32>
    %cst_16 = arith.constant 1.000000e+00 : f32
    %54 = vector.broadcast %cst_16 : f32 to vector<8x128xf32>
    %55 = arith.subf %54, %48 : vector<8x128xf32>
    %56 = arith.mulf %55, %53 : vector<8x128xf32>
    %57 = arith.mulf %48, %37 : vector<8x128xf32>
    %58 = arith.addf %56, %57 : vector<8x128xf32>
    %c0_17 = arith.constant 0 : index
    %c0_18 = arith.constant 0 : index
    %59 = vector.load %arg9[%c0_17, %c0_18] : memref<64x128xf32, #tpu.memory_space<vmem>>, vector<8x128xf32>
    tpu.vector_store %arg9[%c0_17, %c0_18], %58 {strides = array<i32>} : memref<64x128xf32, #tpu.memory_space<vmem>>, vector<8x128xf32>,
    %cst_19 = arith.constant dense<0.000000e+00> : vector<8x512xf32>
    %60 = tpu.matmul %58, %9, %cst_19 {dimension_numbers = #tpu.dot_dimension_numbers<[1], [0], [0], [1], [0, 0, 1, 1], [], []>} : vector<8x128xf32>, vector<128x512xf32>, vector<8x512xf32> -> vector<8x512xf32>
    %c16 = arith.constant 16 : index
    %c0_20 = arith.constant 0 : index
    %61 = vector.load %arg8[%c16, %c0_20] : memref<72x512xf32, #tpu.memory_space<vmem>>, vector<8x512xf32>
    %62 = arith.addf %60, %61 : vector<8x512xf32>
    %63 = vector.extract_strided_slice %62 {offsets = [0, 0], sizes = [8, 256], strides = [1, 1]} : vector<8x512xf32> to vector<8x256xf32>
    %64 = arith.negf %63 : vector<8x256xf32>
    %65 = math.exp %64 : vector<8x256xf32>
    %cst_21 = arith.constant 1.000000e+00 : f32
    %66 = vector.broadcast %cst_21 : f32 to vector<8x256xf32>
    %67 = arith.addf %66, %65 : vector<8x256xf32>
    %68 = arith.divf %66, %67 : vector<8x256xf32>
    %69 = vector.extract_strided_slice %68 {offsets = [0, 0], sizes = [8, 128], strides = [1, 1]} : vector<8x256xf32> to vector<8x128xf32>
    %70 = vector.extract_strided_slice %68 {offsets = [0, 128], sizes = [8, 128], strides = [1, 1]} : vector<8x256xf32> to vector<8x128xf32>
    %71 = vector.extract_strided_slice %62 {offsets = [0, 384], sizes = [8, 128], strides = [1, 1]} : vector<8x512xf32> to vector<8x128xf32>
    %72 = vector.extract_strided_slice %62 {offsets = [0, 256], sizes = [8, 128], strides = [1, 1]} : vector<8x512xf32> to vector<8x128xf32>
    %73 = arith.mulf %69, %72 : vector<8x128xf32>
    %74 = arith.addf %71, %73 : vector<8x128xf32>
    %75 = math.tanh %74 : vector<8x128xf32>
    %cst_22 = arith.constant 1.000000e+00 : f32
    %76 = vector.broadcast %cst_22 : f32 to vector<8x128xf32>
    %77 = arith.subf %76, %70 : vector<8x128xf32>
    %78 = arith.mulf %77, %75 : vector<8x128xf32>
    %79 = arith.mulf %70, %58 : vector<8x128xf32>
    %80 = arith.addf %78, %79 : vector<8x128xf32>
    %c8_23 = arith.constant 8 : index
    %c0_24 = arith.constant 0 : index
    %81 = vector.load %arg9[%c8_23, %c0_24] : memref<64x128xf32, #tpu.memory_space<vmem>>, vector<8x128xf32>
    tpu.vector_store %arg9[%c8_23, %c0_24], %80 {strides = array<i32>} : memref<64x128xf32, #tpu.memory_space<vmem>>, vector<8x128xf32>,
    %cst_25 = arith.constant dense<0.000000e+00> : vector<8x512xf32>
    %82 = tpu.matmul %80, %9, %cst_25 {dimension_numbers = #tpu.dot_dimension_numbers<[1], [0], [0], [1], [0, 0, 1, 1], [], []>} : vector<8x128xf32>, vector<128x512xf32>, vector<8x512xf32> -> vector<8x512xf32>
    %c24 = arith.constant 24 : index
    %c0_26 = arith.constant 0 : index
    %83 = vector.load %arg8[%c24, %c0_26] : memref<72x512xf32, #tpu.memory_space<vmem>>, vector<8x512xf32>
    %84 = arith.addf %82, %83 : vector<8x512xf32>
    %85 = vector.extract_strided_slice %84 {offsets = [0, 0], sizes = [8, 256], strides = [1, 1]} : vector<8x512xf32> to vector<8x256xf32>
    %86 = arith.negf %85 : vector<8x256xf32>
    %87 = math.exp %86 : vector<8x256xf32>
    %cst_27 = arith.constant 1.000000e+00 : f32
    %88 = vector.broadcast %cst_27 : f32 to vector<8x256xf32>
    %89 = arith.addf %88, %87 : vector<8x256xf32>
    %90 = arith.divf %88, %89 : vector<8x256xf32>
    %91 = vector.extract_strided_slice %90 {offsets = [0, 0], sizes = [8, 128], strides = [1, 1]} : vector<8x256xf32> to vector<8x128xf32>
    %92 = vector.extract_strided_slice %90 {offsets = [0, 128], sizes = [8, 128], strides = [1, 1]} : vector<8x256xf32> to vector<8x128xf32>
    %93 = vector.extract_strided_slice %84 {offsets = [0, 384], sizes = [8, 128], strides = [1, 1]} : vector<8x512xf32> to vector<8x128xf32>
    %94 = vector.extract_strided_slice %84 {offsets = [0, 256], sizes = [8, 128], strides = [1, 1]} : vector<8x512xf32> to vector<8x128xf32>
    %95 = arith.mulf %91, %94 : vector<8x128xf32>
    %96 = arith.addf %93, %95 : vector<8x128xf32>
    %97 = math.tanh %96 : vector<8x128xf32>
    %cst_28 = arith.constant 1.000000e+00 : f32
    %98 = vector.broadcast %cst_28 : f32 to vector<8x128xf32>
    %99 = arith.subf %98, %92 : vector<8x128xf32>
    %100 = arith.mulf %99, %97 : vector<8x128xf32>
    %101 = arith.mulf %92, %80 : vector<8x128xf32>
    %102 = arith.addf %100, %101 : vector<8x128xf32>
    %c16_29 = arith.constant 16 : index
    %c0_30 = arith.constant 0 : index
    %103 = vector.load %arg9[%c16_29, %c0_30] : memref<64x128xf32, #tpu.memory_space<vmem>>, vector<8x128xf32>
    tpu.vector_store %arg9[%c16_29, %c0_30], %102 {strides = array<i32>} : memref<64x128xf32, #tpu.memory_space<vmem>>, vector<8x128xf32>,
    %cst_31 = arith.constant dense<0.000000e+00> : vector<8x512xf32>
    %104 = tpu.matmul %102, %9, %cst_31 {dimension_numbers = #tpu.dot_dimension_numbers<[1], [0], [0], [1], [0, 0, 1, 1], [], []>} : vector<8x128xf32>, vector<128x512xf32>, vector<8x512xf32> -> vector<8x512xf32>
    %c32 = arith.constant 32 : index
    %c0_32 = arith.constant 0 : index
    %105 = vector.load %arg8[%c32, %c0_32] : memref<72x512xf32, #tpu.memory_space<vmem>>, vector<8x512xf32>
    %106 = arith.addf %104, %105 : vector<8x512xf32>
    %107 = vector.extract_strided_slice %106 {offsets = [0, 0], sizes = [8, 256], strides = [1, 1]} : vector<8x512xf32> to vector<8x256xf32>
    %108 = arith.negf %107 : vector<8x256xf32>
    %109 = math.exp %108 : vector<8x256xf32>
    %cst_33 = arith.constant 1.000000e+00 : f32
    %110 = vector.broadcast %cst_33 : f32 to vector<8x256xf32>
    %111 = arith.addf %110, %109 : vector<8x256xf32>
    %112 = arith.divf %110, %111 : vector<8x256xf32>
    %113 = vector.extract_strided_slice %112 {offsets = [0, 0], sizes = [8, 128], strides = [1, 1]} : vector<8x256xf32> to vector<8x128xf32>
    %114 = vector.extract_strided_slice %112 {offsets = [0, 128], sizes = [8, 128], strides = [1, 1]} : vector<8x256xf32> to vector<8x128xf32>
    %115 = vector.extract_strided_slice %106 {offsets = [0, 384], sizes = [8, 128], strides = [1, 1]} : vector<8x512xf32> to vector<8x128xf32>
    %116 = vector.extract_strided_slice %106 {offsets = [0, 256], sizes = [8, 128], strides = [1, 1]} : vector<8x512xf32> to vector<8x128xf32>
    %117 = arith.mulf %113, %116 : vector<8x128xf32>
    %118 = arith.addf %115, %117 : vector<8x128xf32>
    %119 = math.tanh %118 : vector<8x128xf32>
    %cst_34 = arith.constant 1.000000e+00 : f32
    %120 = vector.broadcast %cst_34 : f32 to vector<8x128xf32>
    %121 = arith.subf %120, %114 : vector<8x128xf32>
    %122 = arith.mulf %121, %119 : vector<8x128xf32>
    %123 = arith.mulf %114, %102 : vector<8x128xf32>
    %124 = arith.addf %122, %123 : vector<8x128xf32>
    %c24_35 = arith.constant 24 : index
    %c0_36 = arith.constant 0 : index
    %125 = vector.load %arg9[%c24_35, %c0_36] : memref<64x128xf32, #tpu.memory_space<vmem>>, vector<8x128xf32>
    tpu.vector_store %arg9[%c24_35, %c0_36], %124 {strides = array<i32>} : memref<64x128xf32, #tpu.memory_space<vmem>>, vector<8x128xf32>,
    %cst_37 = arith.constant dense<0.000000e+00> : vector<8x512xf32>
    %126 = tpu.matmul %124, %9, %cst_37 {dimension_numbers = #tpu.dot_dimension_numbers<[1], [0], [0], [1], [0, 0, 1, 1], [], []>} : vector<8x128xf32>, vector<128x512xf32>, vector<8x512xf32> -> vector<8x512xf32>
    %c40 = arith.constant 40 : index
    %c0_38 = arith.constant 0 : index
    %127 = vector.load %arg8[%c40, %c0_38] : memref<72x512xf32, #tpu.memory_space<vmem>>, vector<8x512xf32>
    %128 = arith.addf %126, %127 : vector<8x512xf32>
    %129 = vector.extract_strided_slice %128 {offsets = [0, 0], sizes = [8, 256], strides = [1, 1]} : vector<8x512xf32> to vector<8x256xf32>
    %130 = arith.negf %129 : vector<8x256xf32>
    %131 = math.exp %130 : vector<8x256xf32>
    %cst_39 = arith.constant 1.000000e+00 : f32
    %132 = vector.broadcast %cst_39 : f32 to vector<8x256xf32>
    %133 = arith.addf %132, %131 : vector<8x256xf32>
    %134 = arith.divf %132, %133 : vector<8x256xf32>
    %135 = vector.extract_strided_slice %134 {offsets = [0, 0], sizes = [8, 128], strides = [1, 1]} : vector<8x256xf32> to vector<8x128xf32>
    %136 = vector.extract_strided_slice %134 {offsets = [0, 128], sizes = [8, 128], strides = [1, 1]} : vector<8x256xf32> to vector<8x128xf32>
    %137 = vector.extract_strided_slice %128 {offsets = [0, 384], sizes = [8, 128], strides = [1, 1]} : vector<8x512xf32> to vector<8x128xf32>
    %138 = vector.extract_strided_slice %128 {offsets = [0, 256], sizes = [8, 128], strides = [1, 1]} : vector<8x512xf32> to vector<8x128xf32>
    %139 = arith.mulf %135, %138 : vector<8x128xf32>
    %140 = arith.addf %137, %139 : vector<8x128xf32>
    %141 = math.tanh %140 : vector<8x128xf32>
    %cst_40 = arith.constant 1.000000e+00 : f32
    %142 = vector.broadcast %cst_40 : f32 to vector<8x128xf32>
    %143 = arith.subf %142, %136 : vector<8x128xf32>
    %144 = arith.mulf %143, %141 : vector<8x128xf32>
    %145 = arith.mulf %136, %124 : vector<8x128xf32>
    %146 = arith.addf %144, %145 : vector<8x128xf32>
    %c32_41 = arith.constant 32 : index
    %c0_42 = arith.constant 0 : index
    %147 = vector.load %arg9[%c32_41, %c0_42] : memref<64x128xf32, #tpu.memory_space<vmem>>, vector<8x128xf32>
    tpu.vector_store %arg9[%c32_41, %c0_42], %146 {strides = array<i32>} : memref<64x128xf32, #tpu.memory_space<vmem>>, vector<8x128xf32>,
    %cst_43 = arith.constant dense<0.000000e+00> : vector<8x512xf32>
    %148 = tpu.matmul %146, %9, %cst_43 {dimension_numbers = #tpu.dot_dimension_numbers<[1], [0], [0], [1], [0, 0, 1, 1], [], []>} : vector<8x128xf32>, vector<128x512xf32>, vector<8x512xf32> -> vector<8x512xf32>
    %c48 = arith.constant 48 : index
    %c0_44 = arith.constant 0 : index
    %149 = vector.load %arg8[%c48, %c0_44] : memref<72x512xf32, #tpu.memory_space<vmem>>, vector<8x512xf32>
    %150 = arith.addf %148, %149 : vector<8x512xf32>
    %151 = vector.extract_strided_slice %150 {offsets = [0, 0], sizes = [8, 256], strides = [1, 1]} : vector<8x512xf32> to vector<8x256xf32>
    %152 = arith.negf %151 : vector<8x256xf32>
    %153 = math.exp %152 : vector<8x256xf32>
    %cst_45 = arith.constant 1.000000e+00 : f32
    %154 = vector.broadcast %cst_45 : f32 to vector<8x256xf32>
    %155 = arith.addf %154, %153 : vector<8x256xf32>
    %156 = arith.divf %154, %155 : vector<8x256xf32>
    %157 = vector.extract_strided_slice %156 {offsets = [0, 0], sizes = [8, 128], strides = [1, 1]} : vector<8x256xf32> to vector<8x128xf32>
    %158 = vector.extract_strided_slice %156 {offsets = [0, 128], sizes = [8, 128], strides = [1, 1]} : vector<8x256xf32> to vector<8x128xf32>
    %159 = vector.extract_strided_slice %150 {offsets = [0, 384], sizes = [8, 128], strides = [1, 1]} : vector<8x512xf32> to vector<8x128xf32>
    %160 = vector.extract_strided_slice %150 {offsets = [0, 256], sizes = [8, 128], strides = [1, 1]} : vector<8x512xf32> to vector<8x128xf32>
    %161 = arith.mulf %157, %160 : vector<8x128xf32>
    %162 = arith.addf %159, %161 : vector<8x128xf32>
    %163 = math.tanh %162 : vector<8x128xf32>
    %cst_46 = arith.constant 1.000000e+00 : f32
    %164 = vector.broadcast %cst_46 : f32 to vector<8x128xf32>
    %165 = arith.subf %164, %158 : vector<8x128xf32>
    %166 = arith.mulf %165, %163 : vector<8x128xf32>
    %167 = arith.mulf %158, %146 : vector<8x128xf32>
    %168 = arith.addf %166, %167 : vector<8x128xf32>
    %c40_47 = arith.constant 40 : index
    %c0_48 = arith.constant 0 : index
    %169 = vector.load %arg9[%c40_47, %c0_48] : memref<64x128xf32, #tpu.memory_space<vmem>>, vector<8x128xf32>
    tpu.vector_store %arg9[%c40_47, %c0_48], %168 {strides = array<i32>} : memref<64x128xf32, #tpu.memory_space<vmem>>, vector<8x128xf32>,
    %cst_49 = arith.constant dense<0.000000e+00> : vector<8x512xf32>
    %170 = tpu.matmul %168, %9, %cst_49 {dimension_numbers = #tpu.dot_dimension_numbers<[1], [0], [0], [1], [0, 0, 1, 1], [], []>} : vector<8x128xf32>, vector<128x512xf32>, vector<8x512xf32> -> vector<8x512xf32>
    %c56 = arith.constant 56 : index
    %c0_50 = arith.constant 0 : index
    %171 = vector.load %arg8[%c56, %c0_50] : memref<72x512xf32, #tpu.memory_space<vmem>>, vector<8x512xf32>
    %172 = arith.addf %170, %171 : vector<8x512xf32>
    %173 = vector.extract_strided_slice %172 {offsets = [0, 0], sizes = [8, 256], strides = [1, 1]} : vector<8x512xf32> to vector<8x256xf32>
    %174 = arith.negf %173 : vector<8x256xf32>
    %175 = math.exp %174 : vector<8x256xf32>
    %cst_51 = arith.constant 1.000000e+00 : f32
    %176 = vector.broadcast %cst_51 : f32 to vector<8x256xf32>
    %177 = arith.addf %176, %175 : vector<8x256xf32>
    %178 = arith.divf %176, %177 : vector<8x256xf32>
    %179 = vector.extract_strided_slice %178 {offsets = [0, 0], sizes = [8, 128], strides = [1, 1]} : vector<8x256xf32> to vector<8x128xf32>
    %180 = vector.extract_strided_slice %178 {offsets = [0, 128], sizes = [8, 128], strides = [1, 1]} : vector<8x256xf32> to vector<8x128xf32>
    %181 = vector.extract_strided_slice %172 {offsets = [0, 384], sizes = [8, 128], strides = [1, 1]} : vector<8x512xf32> to vector<8x128xf32>
    %182 = vector.extract_strided_slice %172 {offsets = [0, 256], sizes = [8, 128], strides = [1, 1]} : vector<8x512xf32> to vector<8x128xf32>
    %183 = arith.mulf %179, %182 : vector<8x128xf32>
    %184 = arith.addf %181, %183 : vector<8x128xf32>
    %185 = math.tanh %184 : vector<8x128xf32>
    %cst_52 = arith.constant 1.000000e+00 : f32
    %186 = vector.broadcast %cst_52 : f32 to vector<8x128xf32>
    %187 = arith.subf %186, %180 : vector<8x128xf32>
    %188 = arith.mulf %187, %185 : vector<8x128xf32>
    %189 = arith.mulf %180, %168 : vector<8x128xf32>
    %190 = arith.addf %188, %189 : vector<8x128xf32>
    %c48_53 = arith.constant 48 : index
    %c0_54 = arith.constant 0 : index
    %191 = vector.load %arg9[%c48_53, %c0_54] : memref<64x128xf32, #tpu.memory_space<vmem>>, vector<8x128xf32>
    tpu.vector_store %arg9[%c48_53, %c0_54], %190 {strides = array<i32>} : memref<64x128xf32, #tpu.memory_space<vmem>>, vector<8x128xf32>,
    %cst_55 = arith.constant dense<0.000000e+00> : vector<8x512xf32>
    %192 = tpu.matmul %190, %9, %cst_55 {dimension_numbers = #tpu.dot_dimension_numbers<[1], [0], [0], [1], [0, 0, 1, 1], [], []>} : vector<8x128xf32>, vector<128x512xf32>, vector<8x512xf32> -> vector<8x512xf32>
    %c64 = arith.constant 64 : index
    %c0_56 = arith.constant 0 : index
    %193 = vector.load %arg8[%c64, %c0_56] : memref<72x512xf32, #tpu.memory_space<vmem>>, vector<8x512xf32>
    %194 = arith.addf %192, %193 : vector<8x512xf32>
    %195 = vector.extract_strided_slice %194 {offsets = [0, 0], sizes = [8, 256], strides = [1, 1]} : vector<8x512xf32> to vector<8x256xf32>
    %196 = arith.negf %195 : vector<8x256xf32>
    %197 = math.exp %196 : vector<8x256xf32>
    %cst_57 = arith.constant 1.000000e+00 : f32
    %198 = vector.broadcast %cst_57 : f32 to vector<8x256xf32>
    %199 = arith.addf %198, %197 : vector<8x256xf32>
    %200 = arith.divf %198, %199 : vector<8x256xf32>
    %201 = vector.extract_strided_slice %200 {offsets = [0, 0], sizes = [8, 128], strides = [1, 1]} : vector<8x256xf32> to vector<8x128xf32>
    %202 = vector.extract_strided_slice %200 {offsets = [0, 128], sizes = [8, 128], strides = [1, 1]} : vector<8x256xf32> to vector<8x128xf32>
    %203 = vector.extract_strided_slice %194 {offsets = [0, 384], sizes = [8, 128], strides = [1, 1]} : vector<8x512xf32> to vector<8x128xf32>
    %204 = vector.extract_strided_slice %194 {offsets = [0, 256], sizes = [8, 128], strides = [1, 1]} : vector<8x512xf32> to vector<8x128xf32>
    %205 = arith.mulf %201, %204 : vector<8x128xf32>
    %206 = arith.addf %203, %205 : vector<8x128xf32>
    %207 = math.tanh %206 : vector<8x128xf32>
    %cst_58 = arith.constant 1.000000e+00 : f32
    %208 = vector.broadcast %cst_58 : f32 to vector<8x128xf32>
    %209 = arith.subf %208, %202 : vector<8x128xf32>
    %210 = arith.mulf %209, %207 : vector<8x128xf32>
    %211 = arith.mulf %202, %190 : vector<8x128xf32>
    %212 = arith.addf %210, %211 : vector<8x128xf32>
    %c56_59 = arith.constant 56 : index
    %c0_60 = arith.constant 0 : index
    %213 = vector.load %arg9[%c56_59, %c0_60] : memref<64x128xf32, #tpu.memory_space<vmem>>, vector<8x128xf32>
    tpu.vector_store %arg9[%c56_59, %c0_60], %212 {strides = array<i32>} : memref<64x128xf32, #tpu.memory_space<vmem>>, vector<8x128xf32>,
    %c0_61 = arith.constant 0 : index
    %c0_62 = arith.constant 0 : index
    %214 = vector.load %arg9[%c0_61, %c0_62] : memref<64x128xf32, #tpu.memory_space<vmem>>, vector<64x128xf32>
    %c0_63 = arith.constant 0 : index
    %c0_64 = arith.constant 0 : index
    %215 = vector.load %arg3[%c0_63, %c0_64] : memref<128x16xf32, #tpu.memory_space<vmem>>, vector<128x16xf32>
    %cst_65 = arith.constant dense<0.000000e+00> : vector<64x16xf32>
    %216 = tpu.matmul %214, %215, %cst_65 {dimension_numbers = #tpu.dot_dimension_numbers<[1], [0], [0], [1], [0, 0, 1, 1], [], []>} : vector<64x128xf32>, vector<128x16xf32>, vector<64x16xf32> -> vector<64x16xf32>
    %c0_66 = arith.constant 0 : index
    %c0_67 = arith.constant 0 : index
    %217 = vector.load %arg4[%c0_66, %c0_67] : memref<1x16xf32, #tpu.memory_space<vmem>>, vector<1x16xf32>
    %218 = vector.broadcast %217 : vector<1x16xf32> to vector<64x16xf32>
    %219 = arith.addf %216, %218 : vector<64x16xf32>
    %c0_68 = arith.constant 0 : index
    %c0_69 = arith.constant 0 : index
    %220 = vector.load %arg5[%c0_68, %c0_69] : memref<24x64xf32, #tpu.memory_space<vmem>>, vector<24x64xf32>
    %cst_70 = arith.constant dense<0.000000e+00> : vector<24x16xf32>
    %221 = tpu.matmul %220, %219, %cst_70 {dimension_numbers = #tpu.dot_dimension_numbers<[1], [0], [0], [1], [0, 0, 1, 1], [], []>} : vector<24x64xf32>, vector<64x16xf32>, vector<24x16xf32> -> vector<24x16xf32>
    %c0_71 = arith.constant 0 : index
    %c0_72 = arith.constant 0 : index
    %222 = vector.load %arg6[%c0_71, %c0_72] : memref<12x1xf32, #tpu.memory_space<vmem>>, vector<12x1xf32>
    %223 = vector.extract_strided_slice %221 {offsets = [0, 0], sizes = [12, 16], strides = [1, 1]} : vector<24x16xf32> to vector<12x16xf32>
    %224 = vector.broadcast %222 : vector<12x1xf32> to vector<12x16xf32>
    %225 = arith.addf %223, %224 : vector<12x16xf32>
    %c0_73 = arith.constant 0 : index
    %c0_74 = arith.constant 0 : index
    %c0_75 = arith.constant 0 : index
    %226 = vector.load %arg7[%c0_73, %c0_74, %c0_75] : memref<2x12x16xf32, #tpu.memory_space<vmem>>, vector<1x12x16xf32>
    %227 = vector.shape_cast %226 : vector<1x12x16xf32> to vector<12x16xf32>
    %228 = vector.shape_cast %225 : vector<12x16xf32> to vector<1x12x16xf32>
    tpu.vector_store %arg7[%c0_73, %c0_74, %c0_75], %228 {strides = array<i32>} : memref<2x12x16xf32, #tpu.memory_space<vmem>>, vector<1x12x16xf32>,
    %229 = vector.extract_strided_slice %221 {offsets = [12, 0], sizes = [12, 16], strides = [1, 1]} : vector<24x16xf32> to vector<12x16xf32>
    %230 = vector.broadcast %222 : vector<12x1xf32> to vector<12x16xf32>
    %231 = arith.addf %229, %230 : vector<12x16xf32>
    %c1 = arith.constant 1 : index
    %c0_76 = arith.constant 0 : index
    %c0_77 = arith.constant 0 : index
    %232 = vector.load %arg7[%c1, %c0_76, %c0_77] : memref<2x12x16xf32, #tpu.memory_space<vmem>>, vector<1x12x16xf32>
    %233 = vector.shape_cast %232 : vector<1x12x16xf32> to vector<12x16xf32>
    %234 = vector.shape_cast %231 : vector<12x16xf32> to vector<1x12x16xf32>
    tpu.vector_store %arg7[%c1, %c0_76, %c0_77], %234 {strides = array<i32>} : memref<2x12x16xf32, #tpu.memory_space<vmem>>, vector<1x12x16xf32>,
    return
  }
}

</mosaic_0001>

<llo_original>
// kernel: obfuscator_forward.1
$region0: #{obfuscator_forward.1}
  #allocation0 [shape = 'u32[]', space=smem, size = 0x4, offset = 0x4, fixed_abs, tag = 'smem constant byte address 0x4 - core index']
  #allocation1 [shape = 'u32[144,128]{1,0:T(1,128)}', space=vmem, size = 0x12000, scoped, tag = 'internal scratch']
  #allocation2 [shape = 'f32[72,512]{1,0:T(8,128)}', space=vmem, size = 0x24000, scoped, tag = 'scratch operand']
  #allocation3 [shape = 'f32[64,128]{1,0:T(8,128)}', space=vmem, size = 0x8000, scoped, tag = 'scratch operand']
  %s0 = inlined_call_operand.vmem [shape: s32[72,1], index: 0, kind: input, shape index: {}]
  %s1 = inlined_call_operand.vmem [shape: f32[32,512], index: 1, kind: input, shape index: {}]
  %s2 = inlined_call_operand.vmem [shape: f32[128,512], index: 2, kind: input, shape index: {}]
  %s3 = inlined_call_operand.vmem [shape: f32[128,16], index: 3, kind: input, shape index: {}]
  %s4 = inlined_call_operand.vmem [shape: f32[1,16], index: 4, kind: input, shape index: {}]
  %s5 = inlined_call_operand.vmem [shape: f32[24,64], index: 5, kind: input, shape index: {}]
  %s6 = inlined_call_operand.vmem [shape: f32[12,1], index: 6, kind: input, shape index: {}]
  %s7 = inlined_call_operand.vmem [shape: f32[2,12,16], index: 7, kind: output, shape index: {}]
  %s8 = sld [smem:[#allocation0]]
  $region38: #{obfuscator_forward.1} parent=0
    _
  %s10 = ssub.s32 1, %s8
  %s11 = scalar_select 0, %s10, %s8
  // Predicated region
  $region2: #{obfuscator_forward.1} parent=0 // pred_check
    _
  $region3: #{obfuscator_forward.1} parent=0 // pred_check_branch
    %13 = sbr.rel (0) target = $region5
  $region4: #{obfuscator_forward.1} parent=0 // pred_region
    _
  $region5: #{obfuscator_forward.1} parent=0 // pred_fallthru
    _
  // Predicated region
  $region6: #{obfuscator_forward.1} parent=0 // pred_check
    _
  $region7: #{obfuscator_forward.1} parent=0 // pred_check_branch
    %15 = sbr.rel (0) target = $region9
  $region8: #{obfuscator_forward.1} parent=0 // pred_region
    _
  $region9: #{obfuscator_forward.1} parent=0 // pred_fallthru
    _
  // Predicated region
  $region10: #{obfuscator_forward.1} parent=0 // pred_check
    _
  $region11: #{obfuscator_forward.1} parent=0 // pred_check_branch
    %17 = sbr.rel (0) target = $region13
  $region12: #{obfuscator_forward.1} parent=0 // pred_region
    _
  $region13: #{obfuscator_forward.1} parent=0 // pred_fallthru
    _
  // Predicated region
  $region14: #{obfuscator_forward.1} parent=0 // pred_check
    _
  $region15: #{obfuscator_forward.1} parent=0 // pred_check_branch
    %19 = sbr.rel (0) target = $region17
  $region16: #{obfuscator_forward.1} parent=0 // pred_region
    _
  $region17: #{obfuscator_forward.1} parent=0 // pred_fallthru
    _
  // Predicated region
  $region18: #{obfuscator_forward.1} parent=0 // pred_check
    _
  $region19: #{obfuscator_forward.1} parent=0 // pred_check_branch
    %21 = sbr.rel (0) target = $region21
  $region20: #{obfuscator_forward.1} parent=0 // pred_region
    _
  $region21: #{obfuscator_forward.1} parent=0 // pred_fallthru
    _
  // Predicated region
  $region22: #{obfuscator_forward.1} parent=0 // pred_check
    _
  $region23: #{obfuscator_forward.1} parent=0 // pred_check_branch
    %23 = sbr.rel (0) target = $region25
  $region24: #{obfuscator_forward.1} parent=0 // pred_region
    _
  $region25: #{obfuscator_forward.1} parent=0 // pred_fallthru
    _
  // Predicated region
  $region26: #{obfuscator_forward.1} parent=0 // pred_check
    _
  $region27: #{obfuscator_forward.1} parent=0 // pred_check_branch
    %25 = sbr.rel (0) target = $region29
  $region28: #{obfuscator_forward.1} parent=0 // pred_region
    _
  $region29: #{obfuscator_forward.1} parent=0 // pred_fallthru
    _
  %v26 = vld [vmem:[%s0] sm:$0xff]
  %v27 = vld [vmem:[%s0 + $0x8] sm:$0xff]
  %v28 = vld [vmem:[%s0 + $0x10] sm:$0xff]
  %v29 = vld [vmem:[%s0 + $0x18] sm:$0xff]
  %v30 = vld [vmem:[%s0 + $0x20] sm:$0xff]
  %v31 = vld [vmem:[%s0 + $0x28] sm:$0xff]
  %v32 = vld [vmem:[%s0 + $0x30] sm:$0xff]
  %v33 = vld [vmem:[%s0 + $0x38] sm:$0xff]
  %v34 = vld [vmem:[%s0 + $0x40] sm:$0xff]
  %v35 = vlaneseq
  %v36 = vand.u32 %v35, 127
  %37 = vset.pattern.permute.xlu0 0
  %38 = vperm.xlu0 %37, %v26
  %v39 = vpop.permute.xlu0 %38
  %40 = vset.pattern.permute.xlu0 0
  %41 = vperm.xlu0 %40, %v27
  %v42 = vpop.permute.xlu0 %41
  %43 = vset.pattern.permute.xlu0 0
  %44 = vperm.xlu0 %43, %v28
  %v45 = vpop.permute.xlu0 %44
  %46 = vset.pattern.permute.xlu0 0
  %47 = vperm.xlu0 %46, %v29
  %v48 = vpop.permute.xlu0 %47
  %49 = vset.pattern.permute.xlu0 0
  %50 = vperm.xlu0 %49, %v30
  %v51 = vpop.permute.xlu0 %50
  %52 = vset.pattern.permute.xlu0 0
  %53 = vperm.xlu0 %52, %v31
  %v54 = vpop.permute.xlu0 %53
  %55 = vset.pattern.permute.xlu0 0
  %56 = vperm.xlu0 %55, %v32
  %v57 = vpop.permute.xlu0 %56
  %58 = vset.pattern.permute.xlu0 0
  %59 = vperm.xlu0 %58, %v33
  %v60 = vpop.permute.xlu0 %59
  %61 = vset.pattern.permute.xlu0 0
  %62 = vperm.xlu0 %61, %v34
  %v63 = vpop.permute.xlu0 %62
  %vm64 = vcmp.eq.s32.totalorder %v36, %v39
  %vm65 = vcmp.eq.s32.totalorder %v36, %v42
  %vm66 = vcmp.eq.s32.totalorder %v36, %v45
  %vm67 = vcmp.eq.s32.totalorder %v36, %v48
  %vm68 = vcmp.eq.s32.totalorder %v36, %v51
  %vm69 = vcmp.eq.s32.totalorder %v36, %v54
  %vm70 = vcmp.eq.s32.totalorder %v36, %v57
  %vm71 = vcmp.eq.s32.totalorder %v36, %v60
  %vm72 = vcmp.eq.s32.totalorder %v36, %v63
  %v73 = vsel %vm64, 1, 0
  %v74 = vsel %vm65, 1, 0
  %v75 = vsel %vm66, 1, 0
  %v76 = vsel %vm67, 1, 0
  %v77 = vsel %vm68, 1, 0
  %v78 = vsel %vm69, 1, 0
  %v79 = vsel %vm70, 1, 0
  %v80 = vsel %vm71, 1, 0
  %v81 = vsel %vm72, 1, 0
  %v82 = vcvt.s32.f32 %v73
  %v83 = vcvt.s32.f32 %v74
  %v84 = vcvt.s32.f32 %v75
  %v85 = vcvt.s32.f32 %v76
  %v86 = vcvt.s32.f32 %v77
  %v87 = vcvt.s32.f32 %v78
  %v88 = vcvt.s32.f32 %v79
  %v89 = vcvt.s32.f32 %v80
  %v90 = vcvt.s32.f32 %v81
  %v91 = vld [vmem:[%s1] sm:$0xff]
  %v92 = vld [vmem:[%s1 + $0x8] sm:$0xff]
  %v93 = vld [vmem:[%s1 + $0x10] sm:$0xff]
  %v94 = vld [vmem:[%s1 + $0x18] sm:$0xff]
  %v95 = vld [vmem:[%s1 + $0x20] sm:$0xff]
  %v96 = vld [vmem:[%s1 + $0x28] sm:$0xff]
  %v97 = vld [vmem:[%s1 + $0x30] sm:$0xff]
  %v98 = vld [vmem:[%s1 + $0x38] sm:$0xff]
  %v99 = vld [vmem:[%s1 + $0x40] sm:$0xff]
  %v100 = vld [vmem:[%s1 + $0x48] sm:$0xff]
  %v101 = vld [vmem:[%s1 + $0x50] sm:$0xff]
  %v102 = vld [vmem:[%s1 + $0x58] sm:$0xff]
  %v103 = vld [vmem:[%s1 + $0x60] sm:$0xff]
  %v104 = vld [vmem:[%s1 + $0x68] sm:$0xff]
  %v105 = vld [vmem:[%s1 + $0x70] sm:$0xff]
  %v106 = vld [vmem:[%s1 + $0x78] sm:$0xff]
  %vm107 = vcmask 261120
  %v109 = vsel %vm107, %v82, 0
  %v112 = vsel %vm107, %v83, 0
  %v115 = vsel %vm107, %v84, 0
  %v118 = vsel %vm107, %v85, 0
  %v121 = vsel %vm107, %v86, 0
  %v124 = vsel %vm107, %v87, 0
  %v127 = vsel %vm107, %v88, 0
  %v130 = vsel %vm107, %v89, 0
  %v133 = vsel %vm107, %v90, 0
  %135 = vmatprep.subr.mxu0 %v92
  %136 = vmatpush1.msra.mxu0 %v91
  %137 = vmatprep.subr.mxu0 %v96
  %138 = vmatpush1.msra.mxu0 %v95
  %139 = vmatprep.subr.mxu0 %v100
  %140 = vmatpush1.msra.mxu0 %v99
  %141 = vmatprep.subr.mxu0 %v104
  %142 = vmatpush1.msra.mxu0 %v103
  %143 = vmatprep.subr.mxu0 0.0
  %144 = vmatpush1.msra.mxu0 0.0
  %145 = vmatprep.subr.mxu0 0.0
  %146 = vmatpush1.msra.mxu0 0.0
  %147 = vmatprep.subr.mxu0 0.0
  %148 = vmatpush1.msra.mxu0 0.0
  %149 = vmatprep.subr.mxu0 0.0
  %150 = vmatpush1.msra.mxu0 0.0
  %151 = vmatprep.subr.mxu0 0.0
  %152 = vmatpush1.msra.mxu0 0.0
  %153 = vmatprep.subr.mxu0 0.0
  %154 = vmatpush1.msra.mxu0 0.0
  %155 = vmatprep.subr.mxu0 0.0
  %156 = vmatpush1.msra.mxu0 0.0
  %157 = vmatprep.subr.mxu0 0.0
  %158 = vmatpush1.msra.mxu0 0.0
  %159 = vmatprep.subr.mxu0 0.0
  %160 = vmatpush1.msra.mxu0 0.0
  %161 = vmatprep.subr.mxu0 0.0
  %162 = vmatpush1.msra.mxu0 0.0
  %163 = vmatprep.subr.mxu0 0.0
  %164 = vmatpush1.msra.mxu0 0.0
  %165 = vmatprep.subr.mxu0 0.0
  %166 = vmatpush1.msra.mxu0 0.0
  %167 = vmatprep.subr.mxu0 0.0
  %168 = vmatpush1.msra.mxu0 0.0
  %169 = vmatprep.subr.mxu0 0.0
  %170 = vmatpush1.msra.mxu0 0.0
  %171 = vmatprep.subr.mxu0 0.0
  %172 = vmatpush1.msra.mxu0 0.0
  %173 = vmatprep.subr.mxu0 0.0
  %174 = vmatpush1.msra.mxu0 0.0
  %175 = vmatprep.subr.mxu0 0.0
  %176 = vmatpush1.msra.mxu0 0.0
  %177 = vmatprep.subr.mxu0 0.0
  %178 = vmatpush1.msra.mxu0 0.0
  %179 = vmatprep.subr.mxu0 0.0
  %180 = vmatpush1.msra.mxu0 0.0
  %181 = vmatprep.subr.mxu0 0.0
  %182 = vmatpush1.msra.mxu0 0.0
  %183 = vmatprep.subr.mxu0 0.0
  %184 = vmatpush1.msra.mxu0 0.0
  %185 = vmatprep.subr.mxu0 0.0
  %186 = vmatpush1.msra.mxu0 0.0
  %187 = vmatprep.subr.mxu0 0.0
  %188 = vmatpush1.msra.mxu0 0.0
  %189 = vmatprep.subr.mxu0 0.0
  %190 = vmatpush1.msra.mxu0 0.0
  %191 = vmatprep.subr.mxu0 0.0
  %192 = vmatpush1.msra.mxu0 0.0
  %193 = vmatprep.subr.mxu0 0.0
  %194 = vmatpush1.msra.mxu0 0.0
  %195 = vmatprep.subr.mxu0 0.0
  %196 = vmatpush1.msra.mxu0 0.0
  %197 = vmatprep.subr.mxu0 0.0
  %198 = vmatpush1.msra.mxu0 0.0
  %199 = vmatprep.mubr.f32.mxu0 0.0
  %200 = vmatmul.mubr.f32.gmra.mrb[0].mxu0 %v109
  %v201 = vpop.f32.mrb[0].mxu0
  %v202 = vadd.f32 0.0, %v201
  %v203 = vpop.f32.mrb[0].mxu0
  %v204 = vadd.f32 0.0, %v203
  %205 = vmatprep.mubr.f32.mxu0 0.0
  %206 = vmatmul.mubr.f32.gmra.mrb[0].mxu0 %v112
  %v207 = vpop.f32.mrb[0].mxu0
  %v208 = vadd.f32 0.0, %v207
  %v209 = vpop.f32.mrb[0].mxu0
  %v210 = vadd.f32 0.0, %v209
  %211 = vmatprep.mubr.f32.mxu0 0.0
  %212 = vmatmul.mubr.f32.gmra.mrb[0].mxu0 %v115
  %v213 = vpop.f32.mrb[0].mxu0
  %v214 = vadd.f32 0.0, %v213
  %v215 = vpop.f32.mrb[0].mxu0
  %v216 = vadd.f32 0.0, %v215
  %217 = vmatprep.mubr.f32.mxu0 0.0
  %218 = vmatmul.mubr.f32.gmra.mrb[0].mxu0 %v118
  %v219 = vpop.f32.mrb[0].mxu0
  %v220 = vadd.f32 0.0, %v219
  %v221 = vpop.f32.mrb[0].mxu0
  %v222 = vadd.f32 0.0, %v221
  %223 = vmatprep.mubr.f32.mxu0 0.0
  %224 = vmatmul.mubr.f32.gmra.mrb[0].mxu0 %v121
  %v225 = vpop.f32.mrb[0].mxu0
  %v226 = vadd.f32 0.0, %v225
  %v227 = vpop.f32.mrb[0].mxu0
  %v228 = vadd.f32 0.0, %v227
  %229 = vmatprep.mubr.f32.mxu0 0.0
  %230 = vmatmul.mubr.f32.gmra.mrb[0].mxu0 %v124
  %v231 = vpop.f32.mrb[0].mxu0
  %v232 = vadd.f32 0.0, %v231
  %v233 = vpop.f32.mrb[0].mxu0
  %v234 = vadd.f32 0.0, %v233
  %235 = vmatprep.mubr.f32.mxu0 0.0
  %236 = vmatmul.mubr.f32.gmra.mrb[0].mxu0 %v127
  %v237 = vpop.f32.mrb[0].mxu0
  %v238 = vadd.f32 0.0, %v237
  %v239 = vpop.f32.mrb[0].mxu0
  %v240 = vadd.f32 0.0, %v239
  %241 = vmatprep.mubr.f32.mxu0 0.0
  %242 = vmatmul.mubr.f32.gmra.mrb[0].mxu0 %v130
  %v243 = vpop.f32.mrb[0].mxu0
  %v244 = vadd.f32 0.0, %v243
  %v245 = vpop.f32.mrb[0].mxu0
  %v246 = vadd.f32 0.0, %v245
  %247 = vmatprep.mubr.f32.mxu0 0.0
  %248 = vmatmul.mubr.f32.gmra.mrb[0].mxu0 %v133
  %v249 = vpop.f32.mrb[0].mxu0
  %v250 = vadd.f32 0.0, %v249
  %v251 = vpop.f32.mrb[0].mxu0
  %v252 = vadd.f32 0.0, %v251
  %253 = vdwg.mxu0
  %254 = vmatprep.subr.mxu0 %v94
  %255 = vmatpush1.msra.mxu0 %v93
  %256 = vmatprep.subr.mxu0 %v98
  %257 = vmatpush1.msra.mxu0 %v97
  %258 = vmatprep.subr.mxu0 %v102
  %259 = vmatpush1.msra.mxu0 %v101
  %260 = vmatprep.subr.mxu0 %v106
  %261 = vmatpush1.msra.mxu0 %v105
  %262 = vmatprep.subr.mxu0 0.0
  %263 = vmatpush1.msra.mxu0 0.0
  %264 = vmatprep.subr.mxu0 0.0
  %265 = vmatpush1.msra.mxu0 0.0
  %266 = vmatprep.subr.mxu0 0.0
  %267 = vmatpush1.msra.mxu0 0.0
  %268 = vmatprep.subr.mxu0 0.0
  %269 = vmatpush1.msra.mxu0 0.0
  %270 = vmatprep.subr.mxu0 0.0
  %271 = vmatpush1.msra.mxu0 0.0
  %272 = vmatprep.subr.mxu0 0.0
  %273 = vmatpush1.msra.mxu0 0.0
  %274 = vmatprep.subr.mxu0 0.0
  %275 = vmatpush1.msra.mxu0 0.0
  %276 = vmatprep.subr.mxu0 0.0
  %277 = vmatpush1.msra.mxu0 0.0
  %278 = vmatprep.subr.mxu0 0.0
  %279 = vmatpush1.msra.mxu0 0.0
  %280 = vmatprep.subr.mxu0 0.0
  %281 = vmatpush1.msra.mxu0 0.0
  %282 = vmatprep.subr.mxu0 0.0
  %283 = vmatpush1.msra.mxu0 0.0
  %284 = vmatprep.subr.mxu0 0.0
  %285 = vmatpush1.msra.mxu0 0.0
  %286 = vmatprep.subr.mxu0 0.0
  %287 = vmatpush1.msra.mxu0 0.0
  %288 = vmatprep.subr.mxu0 0.0
  %289 = vmatpush1.msra.mxu0 0.0
  %290 = vmatprep.subr.mxu0 0.0
  %291 = vmatpush1.msra.mxu0 0.0
  %292 = vmatprep.subr.mxu0 0.0
  %293 = vmatpush1.msra.mxu0 0.0
  %294 = vmatprep.subr.mxu0 0.0
  %295 = vmatpush1.msra.mxu0 0.0
  %296 = vmatprep.subr.mxu0 0.0
  %297 = vmatpush1.msra.mxu0 0.0
  %298 = vmatprep.subr.mxu0 0.0
  %299 = vmatpush1.msra.mxu0 0.0
  %300 = vmatprep.subr.mxu0 0.0
  %301 = vmatpush1.msra.mxu0 0.0
  %302 = vmatprep.subr.mxu0 0.0
  %303 = vmatpush1.msra.mxu0 0.0
  %304 = vmatprep.subr.mxu0 0.0
  %305 = vmatpush1.msra.mxu0 0.0
  %306 = vmatprep.subr.mxu0 0.0
  %307 = vmatpush1.msra.mxu0 0.0
  %308 = vmatprep.subr.mxu0 0.0
  %309 = vmatpush1.msra.mxu0 0.0
  %310 = vmatprep.subr.mxu0 0.0
  %311 = vmatpush1.msra.mxu0 0.0
  %312 = vmatprep.subr.mxu0 0.0
  %313 = vmatpush1.msra.mxu0 0.0
  %314 = vmatprep.subr.mxu0 0.0
  %315 = vmatpush1.msra.mxu0 0.0
  %316 = vmatprep.subr.mxu0 0.0
  %317 = vmatpush1.msra.mxu0 0.0
  %318 = vmatprep.mubr.f32.mxu0 0.0
  %319 = vmatmul.mubr.f32.gmra.mrb[0].mxu0 %v109
  %v320 = vpop.f32.mrb[0].mxu0
  %v321 = vadd.f32 0.0, %v320
  %v322 = vpop.f32.mrb[0].mxu0
  %v323 = vadd.f32 0.0, %v322
  %324 = vmatprep.mubr.f32.mxu0 0.0
  %325 = vmatmul.mubr.f32.gmra.mrb[0].mxu0 %v112
  %v326 = vpop.f32.mrb[0].mxu0
  %v327 = vadd.f32 0.0, %v326
  %v328 = vpop.f32.mrb[0].mxu0
  %v329 = vadd.f32 0.0, %v328
  %330 = vmatprep.mubr.f32.mxu0 0.0
  %331 = vmatmul.mubr.f32.gmra.mrb[0].mxu0 %v115
  %v332 = vpop.f32.mrb[0].mxu0
  %v333 = vadd.f32 0.0, %v332
  %v334 = vpop.f32.mrb[0].mxu0
  %v335 = vadd.f32 0.0, %v334
  %336 = vmatprep.mubr.f32.mxu0 0.0
  %337 = vmatmul.mubr.f32.gmra.mrb[0].mxu0 %v118
  %v338 = vpop.f32.mrb[0].mxu0
  %v339 = vadd.f32 0.0, %v338
  %v340 = vpop.f32.mrb[0].mxu0
  %v341 = vadd.f32 0.0, %v340
  %342 = vmatprep.mubr.f32.mxu0 0.0
  %343 = vmatmul.mubr.f32.gmra.mrb[0].mxu0 %v121
  %v344 = vpop.f32.mrb[0].mxu0
  %v345 = vadd.f32 0.0, %v344
  %v346 = vpop.f32.mrb[0].mxu0
  %v347 = vadd.f32 0.0, %v346
  %348 = vmatprep.mubr.f32.mxu0 0.0
  %349 = vmatmul.mubr.f32.gmra.mrb[0].mxu0 %v124
  %v350 = vpop.f32.mrb[0].mxu0
  %v351 = vadd.f32 0.0, %v350
  %v352 = vpop.f32.mrb[0].mxu0
  %v353 = vadd.f32 0.0, %v352
  %354 = vmatprep.mubr.f32.mxu0 0.0
  %355 = vmatmul.mubr.f32.gmra.mrb[0].mxu0 %v127
  %v356 = vpop.f32.mrb[0].mxu0
  %v357 = vadd.f32 0.0, %v356
  %v358 = vpop.f32.mrb[0].mxu0
  %v359 = vadd.f32 0.0, %v358
  %360 = vmatprep.mubr.f32.mxu0 0.0
  %361 = vmatmul.mubr.f32.gmra.mrb[0].mxu0 %v130
  %v362 = vpop.f32.mrb[0].mxu0
  %v363 = vadd.f32 0.0, %v362
  %v364 = vpop.f32.mrb[0].mxu0
  %v365 = vadd.f32 0.0, %v364
  %366 = vmatprep.mubr.f32.mxu0 0.0
  %367 = vmatmul.mubr.f32.gmra.mrb[0].mxu0 %v133
  %v368 = vpop.f32.mrb[0].mxu0
  %v369 = vadd.f32 0.0, %v368
  %v370 = vpop.f32.mrb[0].mxu0
  %v371 = vadd.f32 0.0, %v370
  %372 = vdwg.mxu0
  %373 = vst [vmem:[#allocation2] sm:$0xff] %v202
  %374 = vst [vmem:[#allocation2 + $0x8] sm:$0xff] %v204
  %375 = vst [vmem:[#allocation2 + $0x10] sm:$0xff] %v321
  %376 = vst [vmem:[#allocation2 + $0x18] sm:$0xff] %v323
  %377 = vst [vmem:[#allocation2 + $0x20] sm:$0xff] %v208
  %378 = vst [vmem:[#allocation2 + $0x28] sm:$0xff] %v210
  %379 = vst [vmem:[#allocation2 + $0x30] sm:$0xff] %v327
  %380 = vst [vmem:[#allocation2 + $0x38] sm:$0xff] %v329
  %381 = vst [vmem:[#allocation2 + $0x40] sm:$0xff] %v214
  %382 = vst [vmem:[#allocation2 + $0x48] sm:$0xff] %v216
  %383 = vst [vmem:[#allocation2 + $0x50] sm:$0xff] %v333
  %384 = vst [vmem:[#allocation2 + $0x58] sm:$0xff] %v335
  %385 = vst [vmem:[#allocation2 + $0x60] sm:$0xff] %v220
  %386 = vst [vmem:[#allocation2 + $0x68] sm:$0xff] %v222
  %387 = vst [vmem:[#allocation2 + $0x70] sm:$0xff] %v339
  %388 = vst [vmem:[#allocation2 + $0x78] sm:$0xff] %v341
  %389 = vst [vmem:[#allocation2 + $0x80] sm:$0xff] %v226
  %390 = vst [vmem:[#allocation2 + $0x88] sm:$0xff] %v228
  %391 = vst [vmem:[#allocation2 + $0x90] sm:$0xff] %v345
  %392 = vst [vmem:[#allocation2 + $0x98] sm:$0xff] %v347
  %393 = vst [vmem:[#allocation2 + $0xa0] sm:$0xff] %v232
  %394 = vst [vmem:[#allocation2 + $0xa8] sm:$0xff] %v234
  %395 = vst [vmem:[#allocation2 + $0xb0] sm:$0xff] %v351
  %396 = vst [vmem:[#allocation2 + $0xb8] sm:$0xff] %v353
  %397 = vst [vmem:[#allocation2 + $0xc0] sm:$0xff] %v238
  %398 = vst [vmem:[#allocation2 + $0xc8] sm:$0xff] %v240
  %399 = vst [vmem:[#allocation2 + $0xd0] sm:$0xff] %v357
  %400 = vst [vmem:[#allocation2 + $0xd8] sm:$0xff] %v359
  %401 = vst [vmem:[#allocation2 + $0xe0] sm:$0xff] %v244
  %402 = vst [vmem:[#allocation2 + $0xe8] sm:$0xff] %v246
  %403 = vst [vmem:[#allocation2 + $0xf0] sm:$0xff] %v363
  %404 = vst [vmem:[#allocation2 + $0xf8] sm:$0xff] %v365
  %405 = vst [vmem:[#allocation2 + $0x100] sm:$0xff] %v250
  %406 = vst [vmem:[#allocation2 + $0x108] sm:$0xff] %v252
  %407 = vst [vmem:[#allocation2 + $0x110] sm:$0xff] %v369
  %408 = vst [vmem:[#allocation2 + $0x118] sm:$0xff] %v371
  %v409 = vld [vmem:[%s2] sm:$0xff]
  %v410 = vld [vmem:[%s2 + $0x8] sm:$0xff]
  %v411 = vld [vmem:[%s2 + $0x10] sm:$0xff]
  %v412 = vld [vmem:[%s2 + $0x18] sm:$0xff]
  %v413 = vld [vmem:[%s2 + $0x20] sm:$0xff]
  %v414 = vld [vmem:[%s2 + $0x28] sm:$0xff]
  %v415 = vld [vmem:[%s2 + $0x30] sm:$0xff]
  %v416 = vld [vmem:[%s2 + $0x38] sm:$0xff]
  %v417 = vld [vmem:[%s2 + $0x40] sm:$0xff]
  %v418 = vld [vmem:[%s2 + $0x48] sm:$0xff]
  %v419 = vld [vmem:[%s2 + $0x50] sm:$0xff]
  %v420 = vld [vmem:[%s2 + $0x58] sm:$0xff]
  %v421 = vld [vmem:[%s2 + $0x60] sm:$0xff]
  %v422 = vld [vmem:[%s2 + $0x68] sm:$0xff]
  %v423 = vld [vmem:[%s2 + $0x70] sm:$0xff]
  %v424 = vld [vmem:[%s2 + $0x78] sm:$0xff]
  %v425 = vld [vmem:[%s2 + $0x80] sm:$0xff]
  %v426 = vld [vmem:[%s2 + $0x88] sm:$0xff]
  %v427 = vld [vmem:[%s2 + $0x90] sm:$0xff]
  %v428 = vld [vmem:[%s2 + $0x98] sm:$0xff]
  %v429 = vld [vmem:[%s2 + $0xa0] sm:$0xff]
  %v430 = vld [vmem:[%s2 + $0xa8] sm:$0xff]
  %v431 = vld [vmem:[%s2 + $0xb0] sm:$0xff]
  %v432 = vld [vmem:[%s2 + $0xb8] sm:$0xff]
  %v433 = vld [vmem:[%s2 + $0xc0] sm:$0xff]
  %v434 = vld [vmem:[%s2 + $0xc8] sm:$0xff]
  %v435 = vld [vmem:[%s2 + $0xd0] sm:$0xff]
  %v436 = vld [vmem:[%s2 + $0xd8] sm:$0xff]
  %v437 = vld [vmem:[%s2 + $0xe0] sm:$0xff]
  %v438 = vld [vmem:[%s2 + $0xe8] sm:$0xff]
  %v439 = vld [vmem:[%s2 + $0xf0] sm:$0xff]
  %v440 = vld [vmem:[%s2 + $0xf8] sm:$0xff]
  %v441 = vld [vmem:[%s2 + $0x100] sm:$0xff]
  %v442 = vld [vmem:[%s2 + $0x108] sm:$0xff]
  %v443 = vld [vmem:[%s2 + $0x110] sm:$0xff]
  %v444 = vld [vmem:[%s2 + $0x118] sm:$0xff]
  %v445 = vld [vmem:[%s2 + $0x120] sm:$0xff]
  %v446 = vld [vmem:[%s2 + $0x128] sm:$0xff]
  %v447 = vld [vmem:[%s2 + $0x130] sm:$0xff]
  %v448 = vld [vmem:[%s2 + $0x138] sm:$0xff]
  %v449 = vld [vmem:[%s2 + $0x140] sm:$0xff]
  %v450 = vld [vmem:[%s2 + $0x148] sm:$0xff]
  %v451 = vld [vmem:[%s2 + $0x150] sm:$0xff]
  %v452 = vld [vmem:[%s2 + $0x158] sm:$0xff]
  %v453 = vld [vmem:[%s2 + $0x160] sm:$0xff]
  %v454 = vld [vmem:[%s2 + $0x168] sm:$0xff]
  %v455 = vld [vmem:[%s2 + $0x170] sm:$0xff]
  %v456 = vld [vmem:[%s2 + $0x178] sm:$0xff]
  %v457 = vld [vmem:[%s2 + $0x180] sm:$0xff]
  %v458 = vld [vmem:[%s2 + $0x188] sm:$0xff]
  %v459 = vld [vmem:[%s2 + $0x190] sm:$0xff]
  %v460 = vld [vmem:[%s2 + $0x198] sm:$0xff]
  %v461 = vld [vmem:[%s2 + $0x1a0] sm:$0xff]
  %v462 = vld [vmem:[%s2 + $0x1a8] sm:$0xff]
  %v463 = vld [vmem:[%s2 + $0x1b0] sm:$0xff]
  %v464 = vld [vmem:[%s2 + $0x1b8] sm:$0xff]
  %v465 = vld [vmem:[%s2 + $0x1c0] sm:$0xff]
  %v466 = vld [vmem:[%s2 + $0x1c8] sm:$0xff]
  %v467 = vld [vmem:[%s2 + $0x1d0] sm:$0xff]
  %v468 = vld [vmem:[%s2 + $0x1d8] sm:$0xff]
  %v469 = vld [vmem:[%s2 + $0x1e0] sm:$0xff]
  %v470 = vld [vmem:[%s2 + $0x1e8] sm:$0xff]
  %v471 = vld [vmem:[%s2 + $0x1f0] sm:$0xff]
  %v472 = vld [vmem:[%s2 + $0x1f8] sm:$0xff]
  %vm473 = vcmp.lt.s32.totalorder %v36, 64
  %v474 = vsel %vm473, 1, 0
  %v475 = vcvt.s32.f32 %v474
  %v476 = vld [vmem:[#allocation2] sm:$0xff]
  %v477 = vld [vmem:[#allocation2 + $0x8] sm:$0xff]
  %v478 = vld [vmem:[#allocation2 + $0x10] sm:$0xff]
  %v479 = vld [vmem:[#allocation2 + $0x18] sm:$0xff]
  %480 = vmatprep.subr.mxu0 %v410
  %481 = vmatpush1.msra.mxu0 %v409
  %482 = vmatprep.subr.mxu0 %v414
  %483 = vmatpush1.msra.mxu0 %v413
  %484 = vmatprep.subr.mxu0 %v418
  %485 = vmatpush1.msra.mxu0 %v417
  %486 = vmatprep.subr.mxu0 %v422
  %487 = vmatpush1.msra.mxu0 %v421
  %488 = vmatprep.subr.mxu0 %v426
  %489 = vmatpush1.msra.mxu0 %v425
  %490 = vmatprep.subr.mxu0 %v430
  %491 = vmatpush1.msra.mxu0 %v429
  %492 = vmatprep.subr.mxu0 %v434
  %493 = vmatpush1.msra.mxu0 %v433
  %494 = vmatprep.subr.mxu0 %v438
  %495 = vmatpush1.msra.mxu0 %v437
  %496 = vmatprep.subr.mxu0 %v442
  %497 = vmatpush1.msra.mxu0 %v441
  %498 = vmatprep.subr.mxu0 %v446
  %499 = vmatpush1.msra.mxu0 %v445
  %500 = vmatprep.subr.mxu0 %v450
  %501 = vmatpush1.msra.mxu0 %v449
  %502 = vmatprep.subr.mxu0 %v454
  %503 = vmatpush1.msra.mxu0 %v453
  %504 = vmatprep.subr.mxu0 %v458
  %505 = vmatpush1.msra.mxu0 %v457
  %506 = vmatprep.subr.mxu0 %v462
  %507 = vmatpush1.msra.mxu0 %v461
  %508 = vmatprep.subr.mxu0 %v466
  %509 = vmatpush1.msra.mxu0 %v465
  %510 = vmatprep.subr.mxu0 %v470
  %511 = vmatpush1.msra.mxu0 %v469
  %512 = vmatprep.subr.mxu0 0.0
  %513 = vmatpush1.msra.mxu0 0.0
  %514 = vmatprep.subr.mxu0 0.0
  %515 = vmatpush1.msra.mxu0 0.0
  %516 = vmatprep.subr.mxu0 0.0
  %517 = vmatpush1.msra.mxu0 0.0
  %518 = vmatprep.subr.mxu0 0.0
  %519 = vmatpush1.msra.mxu0 0.0
  %520 = vmatprep.subr.mxu0 0.0
  %521 = vmatpush1.msra.mxu0 0.0
  %522 = vmatprep.subr.mxu0 0.0
  %523 = vmatpush1.msra.mxu0 0.0
  %524 = vmatprep.subr.mxu0 0.0
  %525 = vmatpush1.msra.mxu0 0.0
  %526 = vmatprep.subr.mxu0 0.0
  %527 = vmatpush1.msra.mxu0 0.0
  %528 = vmatprep.subr.mxu0 0.0
  %529 = vmatpush1.msra.mxu0 0.0
  %530 = vmatprep.subr.mxu0 0.0
  %531 = vmatpush1.msra.mxu0 0.0
  %532 = vmatprep.subr.mxu0 0.0
  %533 = vmatpush1.msra.mxu0 0.0
  %534 = vmatprep.subr.mxu0 0.0
  %535 = vmatpush1.msra.mxu0 0.0
  %536 = vmatprep.subr.mxu0 0.0
  %537 = vmatpush1.msra.mxu0 0.0
  %538 = vmatprep.subr.mxu0 0.0
  %539 = vmatpush1.msra.mxu0 0.0
  %540 = vmatprep.subr.mxu0 0.0
  %541 = vmatpush1.msra.mxu0 0.0
  %542 = vmatprep.subr.mxu0 0.0
  %543 = vmatpush1.msra.mxu0 0.0
  %544 = vmatprep.mubr.f32.mxu0 0.0
  %545 = vmatmul.mubr.f32.gmra.mrb[0].mxu0 0.0
  %v546 = vpop.f32.mrb[0].mxu0
  %v547 = vadd.f32 %v476, %v546
  %v548 = vpop.f32.mrb[0].mxu0
  %v549 = vadd.f32 %v477, %v548
  %550 = vdwg.mxu0
  %551 = vmatprep.subr.mxu0 %v412
  %552 = vmatpush1.msra.mxu0 %v411
  %553 = vmatprep.subr.mxu0 %v416
  %554 = vmatpush1.msra.mxu0 %v415
  %555 = vmatprep.subr.mxu0 %v420
  %556 = vmatpush1.msra.mxu0 %v419
  %557 = vmatprep.subr.mxu0 %v424
  %558 = vmatpush1.msra.mxu0 %v423
  %559 = vmatprep.subr.mxu0 %v428
  %560 = vmatpush1.msra.mxu0 %v427
  %561 = vmatprep.subr.mxu0 %v432
  %562 = vmatpush1.msra.mxu0 %v431
  %563 = vmatprep.subr.mxu0 %v436
  %564 = vmatpush1.msra.mxu0 %v435
  %565 = vmatprep.subr.mxu0 %v440
  %566 = vmatpush1.msra.mxu0 %v439
  %567 = vmatprep.subr.mxu0 %v444
  %568 = vmatpush1.msra.mxu0 %v443
  %569 = vmatprep.subr.mxu0 %v448
  %570 = vmatpush1.msra.mxu0 %v447
  %571 = vmatprep.subr.mxu0 %v452
  %572 = vmatpush1.msra.mxu0 %v451
  %573 = vmatprep.subr.mxu0 %v456
  %574 = vmatpush1.msra.mxu0 %v455
  %575 = vmatprep.subr.mxu0 %v460
  %576 = vmatpush1.msra.mxu0 %v459
  %577 = vmatprep.subr.mxu0 %v464
  %578 = vmatpush1.msra.mxu0 %v463
  %579 = vmatprep.subr.mxu0 %v468
  %580 = vmatpush1.msra.mxu0 %v467
  %581 = vmatprep.subr.mxu0 %v472
  %582 = vmatpush1.msra.mxu0 %v471
  %583 = vmatprep.subr.mxu0 0.0
  %584 = vmatpush1.msra.mxu0 0.0
  %585 = vmatprep.subr.mxu0 0.0
  %586 = vmatpush1.msra.mxu0 0.0
  %587 = vmatprep.subr.mxu0 0.0
  %588 = vmatpush1.msra.mxu0 0.0
  %589 = vmatprep.subr.mxu0 0.0
  %590 = vmatpush1.msra.mxu0 0.0
  %591 = vmatprep.subr.mxu0 0.0
  %592 = vmatpush1.msra.mxu0 0.0
  %593 = vmatprep.subr.mxu0 0.0
  %594 = vmatpush1.msra.mxu0 0.0
  %595 = vmatprep.subr.mxu0 0.0
  %596 = vmatpush1.msra.mxu0 0.0
  %597 = vmatprep.subr.mxu0 0.0
  %598 = vmatpush1.msra.mxu0 0.0
  %599 = vmatprep.subr.mxu0 0.0
  %600 = vmatpush1.msra.mxu0 0.0
  %601 = vmatprep.subr.mxu0 0.0
  %602 = vmatpush1.msra.mxu0 0.0
  %603 = vmatprep.subr.mxu0 0.0
  %604 = vmatpush1.msra.mxu0 0.0
  %605 = vmatprep.subr.mxu0 0.0
  %606 = vmatpush1.msra.mxu0 0.0
  %607 = vmatprep.subr.mxu0 0.0
  %608 = vmatpush1.msra.mxu0 0.0
  %609 = vmatprep.subr.mxu0 0.0
  %610 = vmatpush1.msra.mxu0 0.0
  %611 = vmatprep.subr.mxu0 0.0
  %612 = vmatpush1.msra.mxu0 0.0
  %613 = vmatprep.subr.mxu0 0.0
  %614 = vmatpush1.msra.mxu0 0.0
  %615 = vmatprep.mubr.f32.mxu0 0.0
  %616 = vmatmul.mubr.f32.gmra.mrb[0].mxu0 0.0
  %v617 = vpop.f32.mrb[0].mxu0
  %v618 = vadd.f32 %v478, %v617
  %v619 = vpop.f32.mrb[0].mxu0
  %v620 = vadd.f32 %v479, %v619
  %621 = vdwg.mxu0
  %v622 = vxor.u32 %v547, 2147483648
  %v623 = vxor.u32 %v549, 2147483648
  %v624 = vmul.f32 %v622, 1.442695
  %v625 = vpow.pop %v624
  %v626 = vmul.f32 %v623, 1.442695
  %v627 = vpow.pop %v626
  %v628 = vadd.f32 %v625, 1.0
  %v629 = vadd.f32 %v627, 1.0
  %v630 = vrcp.pop %v628
  %v631 = vmul.f32 1.0, %v630
  %v632 = vrcp.pop %v629
  %v633 = vmul.f32 1.0, %v632
  %v634 = vmul.f32 %v631, %v618
  %v635 = vadd.f32 %v620, %v634
  %v636 = vtanh.pop %v635
  %v637 = vsub.f32 1.0, %v633
  %v638 = vmul.f32 %v637, %v636
  %v639 = vmul.f32 %v633, 0.0
  %v640 = vadd.f32 %v638, %v639
  %v641 = vmul.f32 %v640, %v475
  %v642 = vld [vmem:[#allocation2 + $0x20] sm:$0xff]
  %v643 = vld [vmem:[#allocation2 + $0x28] sm:$0xff]
  %v644 = vld [vmem:[#allocation2 + $0x30] sm:$0xff]
  %v645 = vld [vmem:[#allocation2 + $0x38] sm:$0xff]
  %646 = vmatprep.subr.mxu0 %v410
  %647 = vmatpush1.msra.mxu0 %v409
  %648 = vmatprep.subr.mxu0 %v414
  %649 = vmatpush1.msra.mxu0 %v413
  %650 = vmatprep.subr.mxu0 %v418
  %651 = vmatpush1.msra.mxu0 %v417
  %652 = vmatprep.subr.mxu0 %v422
  %653 = vmatpush1.msra.mxu0 %v421
  %654 = vmatprep.subr.mxu0 %v426
  %655 = vmatpush1.msra.mxu0 %v425
  %656 = vmatprep.subr.mxu0 %v430
  %657 = vmatpush1.msra.mxu0 %v429
  %658 = vmatprep.subr.mxu0 %v434
  %659 = vmatpush1.msra.mxu0 %v433
  %660 = vmatprep.subr.mxu0 %v438
  %661 = vmatpush1.msra.mxu0 %v437
  %662 = vmatprep.subr.mxu0 %v442
  %663 = vmatpush1.msra.mxu0 %v441
  %664 = vmatprep.subr.mxu0 %v446
  %665 = vmatpush1.msra.mxu0 %v445
  %666 = vmatprep.subr.mxu0 %v450
  %667 = vmatpush1.msra.mxu0 %v449
  %668 = vmatprep.subr.mxu0 %v454
  %669 = vmatpush1.msra.mxu0 %v453
  %670 = vmatprep.subr.mxu0 %v458
  %671 = vmatpush1.msra.mxu0 %v457
  %672 = vmatprep.subr.mxu0 %v462
  %673 = vmatpush1.msra.mxu0 %v461
  %674 = vmatprep.subr.mxu0 %v466
  %675 = vmatpush1.msra.mxu0 %v465
  %676 = vmatprep.subr.mxu0 %v470
  %677 = vmatpush1.msra.mxu0 %v469
  %678 = vmatprep.subr.mxu0 0.0
  %679 = vmatpush1.msra.mxu0 0.0
  %680 = vmatprep.subr.mxu0 0.0
  %681 = vmatpush1.msra.mxu0 0.0
  %682 = vmatprep.subr.mxu0 0.0
  %683 = vmatpush1.msra.mxu0 0.0
  %684 = vmatprep.subr.mxu0 0.0
  %685 = vmatpush1.msra.mxu0 0.0
  %686 = vmatprep.subr.mxu0 0.0
  %687 = vmatpush1.msra.mxu0 0.0
  %688 = vmatprep.subr.mxu0 0.0
  %689 = vmatpush1.msra.mxu0 0.0
  %690 = vmatprep.subr.mxu0 0.0
  %691 = vmatpush1.msra.mxu0 0.0
  %692 = vmatprep.subr.mxu0 0.0
  %693 = vmatpush1.msra.mxu0 0.0
  %694 = vmatprep.subr.mxu0 0.0
  %695 = vmatpush1.msra.mxu0 0.0
  %696 = vmatprep.subr.mxu0 0.0
  %697 = vmatpush1.msra.mxu0 0.0
  %698 = vmatprep.subr.mxu0 0.0
  %699 = vmatpush1.msra.mxu0 0.0
  %700 = vmatprep.subr.mxu0 0.0
  %701 = vmatpush1.msra.mxu0 0.0
  %702 = vmatprep.subr.mxu0 0.0
  %703 = vmatpush1.msra.mxu0 0.0
  %704 = vmatprep.subr.mxu0 0.0
  %705 = vmatpush1.msra.mxu0 0.0
  %706 = vmatprep.subr.mxu0 0.0
  %707 = vmatpush1.msra.mxu0 0.0
  %708 = vmatprep.subr.mxu0 0.0
  %709 = vmatpush1.msra.mxu0 0.0
  %710 = vmatprep.mubr.f32.mxu0 0.0
  %711 = vmatmul.mubr.f32.gmra.mrb[0].mxu0 %v641
  %v712 = vpop.f32.mrb[0].mxu0
  %v713 = vadd.f32 %v642, %v712
  %v714 = vpop.f32.mrb[0].mxu0
  %v715 = vadd.f32 %v643, %v714
  %716 = vdwg.mxu0
  %717 = vmatprep.subr.mxu0 %v412
  %718 = vmatpush1.msra.mxu0 %v411
  %719 = vmatprep.subr.mxu0 %v416
  %720 = vmatpush1.msra.mxu0 %v415
  %721 = vmatprep.subr.mxu0 %v420
  %722 = vmatpush1.msra.mxu0 %v419
  %723 = vmatprep.subr.mxu0 %v424
  %724 = vmatpush1.msra.mxu0 %v423
  %725 = vmatprep.subr.mxu0 %v428
  %726 = vmatpush1.msra.mxu0 %v427
  %727 = vmatprep.subr.mxu0 %v432
  %728 = vmatpush1.msra.mxu0 %v431
  %729 = vmatprep.subr.mxu0 %v436
  %730 = vmatpush1.msra.mxu0 %v435
  %731 = vmatprep.subr.mxu0 %v440
  %732 = vmatpush1.msra.mxu0 %v439
  %733 = vmatprep.subr.mxu0 %v444
  %734 = vmatpush1.msra.mxu0 %v443
  %735 = vmatprep.subr.mxu0 %v448
  %736 = vmatpush1.msra.mxu0 %v447
  %737 = vmatprep.subr.mxu0 %v452
  %738 = vmatpush1.msra.mxu0 %v451
  %739 = vmatprep.subr.mxu0 %v456
  %740 = vmatpush1.msra.mxu0 %v455
  %741 = vmatprep.subr.mxu0 %v460
  %742 = vmatpush1.msra.mxu0 %v459
  %743 = vmatprep.subr.mxu0 %v464
  %744 = vmatpush1.msra.mxu0 %v463
  %745 = vmatprep.subr.mxu0 %v468
  %746 = vmatpush1.msra.mxu0 %v467
  %747 = vmatprep.subr.mxu0 %v472
  %748 = vmatpush1.msra.mxu0 %v471
  %749 = vmatprep.subr.mxu0 0.0
  %750 = vmatpush1.msra.mxu0 0.0
  %751 = vmatprep.subr.mxu0 0.0
  %752 = vmatpush1.msra.mxu0 0.0
  %753 = vmatprep.subr.mxu0 0.0
  %754 = vmatpush1.msra.mxu0 0.0
  %755 = vmatprep.subr.mxu0 0.0
  %756 = vmatpush1.msra.mxu0 0.0
  %757 = vmatprep.subr.mxu0 0.0
  %758 = vmatpush1.msra.mxu0 0.0
  %759 = vmatprep.subr.mxu0 0.0
  %760 = vmatpush1.msra.mxu0 0.0
  %761 = vmatprep.subr.mxu0 0.0
  %762 = vmatpush1.msra.mxu0 0.0
  %763 = vmatprep.subr.mxu0 0.0
  %764 = vmatpush1.msra.mxu0 0.0
  %765 = vmatprep.subr.mxu0 0.0
  %766 = vmatpush1.msra.mxu0 0.0
  %767 = vmatprep.subr.mxu0 0.0
  %768 = vmatpush1.msra.mxu0 0.0
  %769 = vmatprep.subr.mxu0 0.0
  %770 = vmatpush1.msra.mxu0 0.0
  %771 = vmatprep.subr.mxu0 0.0
  %772 = vmatpush1.msra.mxu0 0.0
  %773 = vmatprep.subr.mxu0 0.0
  %774 = vmatpush1.msra.mxu0 0.0
  %775 = vmatprep.subr.mxu0 0.0
  %776 = vmatpush1.msra.mxu0 0.0
  %777 = vmatprep.subr.mxu0 0.0
  %778 = vmatpush1.msra.mxu0 0.0
  %779 = vmatprep.subr.mxu0 0.0
  %780 = vmatpush1.msra.mxu0 0.0
  %781 = vmatprep.mubr.f32.mxu0 0.0
  %782 = vmatmul.mubr.f32.gmra.mrb[0].mxu0 %v641
  %v783 = vpop.f32.mrb[0].mxu0
  %v784 = vadd.f32 %v644, %v783
  %v785 = vpop.f32.mrb[0].mxu0
  %v786 = vadd.f32 %v645, %v785
  %787 = vdwg.mxu0
  %v788 = vxor.u32 %v713, 2147483648
  %v789 = vxor.u32 %v715, 2147483648
  %v790 = vmul.f32 %v788, 1.442695
  %v791 = vpow.pop %v790
  %v792 = vmul.f32 %v789, 1.442695
  %v793 = vpow.pop %v792
  %v794 = vadd.f32 %v791, 1.0
  %v795 = vadd.f32 %v793, 1.0
  %v796 = vrcp.pop %v794
  %v797 = vmul.f32 1.0, %v796
  %v798 = vrcp.pop %v795
  %v799 = vmul.f32 1.0, %v798
  %v800 = vmul.f32 %v797, %v784
  %v801 = vadd.f32 %v786, %v800
  %v802 = vtanh.pop %v801
  %v803 = vsub.f32 1.0, %v799
  %v804 = vmul.f32 %v803, %v802
  %v805 = vmul.f32 %v799, %v641
  %v806 = vadd.f32 %v804, %v805
  %807 = vst [vmem:[#allocation3] sm:$0xff] %v806
  %v808 = vld [vmem:[#allocation2 + $0x40] sm:$0xff]
  %v809 = vld [vmem:[#allocation2 + $0x48] sm:$0xff]
  %v810 = vld [vmem:[#allocation2 + $0x50] sm:$0xff]
  %v811 = vld [vmem:[#allocation2 + $0x58] sm:$0xff]
  %812 = vmatprep.subr.mxu0 %v410
  %813 = vmatpush1.msra.mxu0 %v409
  %814 = vmatprep.subr.mxu0 %v414
  %815 = vmatpush1.msra.mxu0 %v413
  %816 = vmatprep.subr.mxu0 %v418
  %817 = vmatpush1.msra.mxu0 %v417
  %818 = vmatprep.subr.mxu0 %v422
  %819 = vmatpush1.msra.mxu0 %v421
  %820 = vmatprep.subr.mxu0 %v426
  %821 = vmatpush1.msra.mxu0 %v425
  %822 = vmatprep.subr.mxu0 %v430
  %823 = vmatpush1.msra.mxu0 %v429
  %824 = vmatprep.subr.mxu0 %v434
  %825 = vmatpush1.msra.mxu0 %v433
  %826 = vmatprep.subr.mxu0 %v438
  %827 = vmatpush1.msra.mxu0 %v437
  %828 = vmatprep.subr.mxu0 %v442
  %829 = vmatpush1.msra.mxu0 %v441
  %830 = vmatprep.subr.mxu0 %v446
  %831 = vmatpush1.msra.mxu0 %v445
  %832 = vmatprep.subr.mxu0 %v450
  %833 = vmatpush1.msra.mxu0 %v449
  %834 = vmatprep.subr.mxu0 %v454
  %835 = vmatpush1.msra.mxu0 %v453
  %836 = vmatprep.subr.mxu0 %v458
  %837 = vmatpush1.msra.mxu0 %v457
  %838 = vmatprep.subr.mxu0 %v462
  %839 = vmatpush1.msra.mxu0 %v461
  %840 = vmatprep.subr.mxu0 %v466
  %841 = vmatpush1.msra.mxu0 %v465
  %842 = vmatprep.subr.mxu0 %v470
  %843 = vmatpush1.msra.mxu0 %v469
  %844 = vmatprep.subr.mxu0 0.0
  %845 = vmatpush1.msra.mxu0 0.0
  %846 = vmatprep.subr.mxu0 0.0
  %847 = vmatpush1.msra.mxu0 0.0
  %848 = vmatprep.subr.mxu0 0.0
  %849 = vmatpush1.msra.mxu0 0.0
  %850 = vmatprep.subr.mxu0 0.0
  %851 = vmatpush1.msra.mxu0 0.0
  %852 = vmatprep.subr.mxu0 0.0
  %853 = vmatpush1.msra.mxu0 0.0
  %854 = vmatprep.subr.mxu0 0.0
  %855 = vmatpush1.msra.mxu0 0.0
  %856 = vmatprep.subr.mxu0 0.0
  %857 = vmatpush1.msra.mxu0 0.0
  %858 = vmatprep.subr.mxu0 0.0
  %859 = vmatpush1.msra.mxu0 0.0
  %860 = vmatprep.subr.mxu0 0.0
  %861 = vmatpush1.msra.mxu0 0.0
  %862 = vmatprep.subr.mxu0 0.0
  %863 = vmatpush1.msra.mxu0 0.0
  %864 = vmatprep.subr.mxu0 0.0
  %865 = vmatpush1.msra.mxu0 0.0
  %866 = vmatprep.subr.mxu0 0.0
  %867 = vmatpush1.msra.mxu0 0.0
  %868 = vmatprep.subr.mxu0 0.0
  %869 = vmatpush1.msra.mxu0 0.0
  %870 = vmatprep.subr.mxu0 0.0
  %871 = vmatpush1.msra.mxu0 0.0
  %872 = vmatprep.subr.mxu0 0.0
  %873 = vmatpush1.msra.mxu0 0.0
  %874 = vmatprep.subr.mxu0 0.0
  %875 = vmatpush1.msra.mxu0 0.0
  %876 = vmatprep.mubr.f32.mxu0 0.0
  %877 = vmatmul.mubr.f32.gmra.mrb[0].mxu0 %v806
  %v878 = vpop.f32.mrb[0].mxu0
  %v879 = vadd.f32 %v808, %v878
  %v880 = vpop.f32.mrb[0].mxu0
  %v881 = vadd.f32 %v809, %v880
  %882 = vdwg.mxu0
  %883 = vmatprep.subr.mxu0 %v412
  %884 = vmatpush1.msra.mxu0 %v411
  %885 = vmatprep.subr.mxu0 %v416
  %886 = vmatpush1.msra.mxu0 %v415
  %887 = vmatprep.subr.mxu0 %v420
  %888 = vmatpush1.msra.mxu0 %v419
  %889 = vmatprep.subr.mxu0 %v424
  %890 = vmatpush1.msra.mxu0 %v423
  %891 = vmatprep.subr.mxu0 %v428
  %892 = vmatpush1.msra.mxu0 %v427
  %893 = vmatprep.subr.mxu0 %v432
  %894 = vmatpush1.msra.mxu0 %v431
  %895 = vmatprep.subr.mxu0 %v436
  %896 = vmatpush1.msra.mxu0 %v435
  %897 = vmatprep.subr.mxu0 %v440
  %898 = vmatpush1.msra.mxu0 %v439
  %899 = vmatprep.subr.mxu0 %v444
  %900 = vmatpush1.msra.mxu0 %v443
  %901 = vmatprep.subr.mxu0 %v448
  %902 = vmatpush1.msra.mxu0 %v447
  %903 = vmatprep.subr.mxu0 %v452
  %904 = vmatpush1.msra.mxu0 %v451
  %905 = vmatprep.subr.mxu0 %v456
  %906 = vmatpush1.msra.mxu0 %v455
  %907 = vmatprep.subr.mxu0 %v460
  %908 = vmatpush1.msra.mxu0 %v459
  %909 = vmatprep.subr.mxu0 %v464
  %910 = vmatpush1.msra.mxu0 %v463
  %911 = vmatprep.subr.mxu0 %v468
  %912 = vmatpush1.msra.mxu0 %v467
  %913 = vmatprep.subr.mxu0 %v472
  %914 = vmatpush1.msra.mxu0 %v471
  %915 = vmatprep.subr.mxu0 0.0
  %916 = vmatpush1.msra.mxu0 0.0
  %917 = vmatprep.subr.mxu0 0.0
  %918 = vmatpush1.msra.mxu0 0.0
  %919 = vmatprep.subr.mxu0 0.0
  %920 = vmatpush1.msra.mxu0 0.0
  %921 = vmatprep.subr.mxu0 0.0
  %922 = vmatpush1.msra.mxu0 0.0
  %923 = vmatprep.subr.mxu0 0.0
  %924 = vmatpush1.msra.mxu0 0.0
  %925 = vmatprep.subr.mxu0 0.0
  %926 = vmatpush1.msra.mxu0 0.0
  %927 = vmatprep.subr.mxu0 0.0
  %928 = vmatpush1.msra.mxu0 0.0
  %929 = vmatprep.subr.mxu0 0.0
  %930 = vmatpush1.msra.mxu0 0.0
  %931 = vmatprep.subr.mxu0 0.0
  %932 = vmatpush1.msra.mxu0 0.0
  %933 = vmatprep.subr.mxu0 0.0
  %934 = vmatpush1.msra.mxu0 0.0
  %935 = vmatprep.subr.mxu0 0.0
  %936 = vmatpush1.msra.mxu0 0.0
  %937 = vmatprep.subr.mxu0 0.0
  %938 = vmatpush1.msra.mxu0 0.0
  %939 = vmatprep.subr.mxu0 0.0
  %940 = vmatpush1.msra.mxu0 0.0
  %941 = vmatprep.subr.mxu0 0.0
  %942 = vmatpush1.msra.mxu0 0.0
  %943 = vmatprep.subr.mxu0 0.0
  %944 = vmatpush1.msra.mxu0 0.0
  %945 = vmatprep.subr.mxu0 0.0
  %946 = vmatpush1.msra.mxu0 0.0
  %947 = vmatprep.mubr.f32.mxu0 0.0
  %948 = vmatmul.mubr.f32.gmra.mrb[0].mxu0 %v806
  %v949 = vpop.f32.mrb[0].mxu0
  %v950 = vadd.f32 %v810, %v949
  %v951 = vpop.f32.mrb[0].mxu0
  %v952 = vadd.f32 %v811, %v951
  %953 = vdwg.mxu0
  %v954 = vxor.u32 %v879, 2147483648
  %v955 = vxor.u32 %v881, 2147483648
  %v956 = vmul.f32 %v954, 1.442695
  %v957 = vpow.pop %v956
  %v958 = vmul.f32 %v955, 1.442695
  %v959 = vpow.pop %v958
  %v960 = vadd.f32 %v957, 1.0
  %v961 = vadd.f32 %v959, 1.0
  %v962 = vrcp.pop %v960
  %v963 = vmul.f32 1.0, %v962
  %v964 = vrcp.pop %v961
  %v965 = vmul.f32 1.0, %v964
  %v966 = vmul.f32 %v963, %v950
  %v967 = vadd.f32 %v952, %v966
  %v968 = vtanh.pop %v967
  %v969 = vsub.f32 1.0, %v965
  %v970 = vmul.f32 %v969, %v968
  %v971 = vmul.f32 %v965, %v806
  %v972 = vadd.f32 %v970, %v971
  %973 = vst [vmem:[#allocation3 + $0x8] sm:$0xff] %v972
  %v974 = vld [vmem:[#allocation2 + $0x60] sm:$0xff]
  %v975 = vld [vmem:[#allocation2 + $0x68] sm:$0xff]
  %v976 = vld [vmem:[#allocation2 + $0x70] sm:$0xff]
  %v977 = vld [vmem:[#allocation2 + $0x78] sm:$0xff]
  %978 = vmatprep.subr.mxu0 %v410
  %979 = vmatpush1.msra.mxu0 %v409
  %980 = vmatprep.subr.mxu0 %v414
  %981 = vmatpush1.msra.mxu0 %v413
  %982 = vmatprep.subr.mxu0 %v418
  %983 = vmatpush1.msra.mxu0 %v417
  %984 = vmatprep.subr.mxu0 %v422
  %985 = vmatpush1.msra.mxu0 %v421
  %986 = vmatprep.subr.mxu0 %v426
  %987 = vmatpush1.msra.mxu0 %v425
  %988 = vmatprep.subr.mxu0 %v430
  %989 = vmatpush1.msra.mxu0 %v429
  %990 = vmatprep.subr.mxu0 %v434
  %991 = vmatpush1.msra.mxu0 %v433
  %992 = vmatprep.subr.mxu0 %v438
  %993 = vmatpush1.msra.mxu0 %v437
  %994 = vmatprep.subr.mxu0 %v442
  %995 = vmatpush1.msra.mxu0 %v441
  %996 = vmatprep.subr.mxu0 %v446
  %997 = vmatpush1.msra.mxu0 %v445
  %998 = vmatprep.subr.mxu0 %v450
  %999 = vmatpush1.msra.mxu0 %v449
  %1000 = vmatprep.subr.mxu0 %v454
  %1001 = vmatpush1.msra.mxu0 %v453
  %1002 = vmatprep.subr.mxu0 %v458
  %1003 = vmatpush1.msra.mxu0 %v457
  %1004 = vmatprep.subr.mxu0 %v462
  %1005 = vmatpush1.msra.mxu0 %v461
  %1006 = vmatprep.subr.mxu0 %v466
  %1007 = vmatpush1.msra.mxu0 %v465
  %1008 = vmatprep.subr.mxu0 %v470
  %1009 = vmatpush1.msra.mxu0 %v469
  %1010 = vmatprep.subr.mxu0 0.0
  %1011 = vmatpush1.msra.mxu0 0.0
  %1012 = vmatprep.subr.mxu0 0.0
  %1013 = vmatpush1.msra.mxu0 0.0
  %1014 = vmatprep.subr.mxu0 0.0
  %1015 = vmatpush1.msra.mxu0 0.0
  %1016 = vmatprep.subr.mxu0 0.0
  %1017 = vmatpush1.msra.mxu0 0.0
  %1018 = vmatprep.subr.mxu0 0.0
  %1019 = vmatpush1.msra.mxu0 0.0
  %1020 = vmatprep.subr.mxu0 0.0
  %1021 = vmatpush1.msra.mxu0 0.0
  %1022 = vmatprep.subr.mxu0 0.0
  %1023 = vmatpush1.msra.mxu0 0.0
  %1024 = vmatprep.subr.mxu0 0.0
  %1025 = vmatpush1.msra.mxu0 0.0
  %1026 = vmatprep.subr.mxu0 0.0
  %1027 = vmatpush1.msra.mxu0 0.0
  %1028 = vmatprep.subr.mxu0 0.0
  %1029 = vmatpush1.msra.mxu0 0.0
  %1030 = vmatprep.subr.mxu0 0.0
  %1031 = vmatpush1.msra.mxu0 0.0
  %1032 = vmatprep.subr.mxu0 0.0
  %1033 = vmatpush1.msra.mxu0 0.0
  %1034 = vmatprep.subr.mxu0 0.0
  %1035 = vmatpush1.msra.mxu0 0.0
  %1036 = vmatprep.subr.mxu0 0.0
  %1037 = vmatpush1.msra.mxu0 0.0
  %1038 = vmatprep.subr.mxu0 0.0
  %1039 = vmatpush1.msra.mxu0 0.0
  %1040 = vmatprep.subr.mxu0 0.0
  %1041 = vmatpush1.msra.mxu0 0.0
  %1042 = vmatprep.mubr.f32.mxu0 0.0
  %1043 = vmatmul.mubr.f32.gmra.mrb[0].mxu0 %v972
  %v1044 = vpop.f32.mrb[0].mxu0
  %v1045 = vadd.f32 %v974, %v1044
  %v1046 = vpop.f32.mrb[0].mxu0
  %v1047 = vadd.f32 %v975, %v1046
  %1048 = vdwg.mxu0
  %1049 = vmatprep.subr.mxu0 %v412
  %1050 = vmatpush1.msra.mxu0 %v411
  %1051 = vmatprep.subr.mxu0 %v416
  %1052 = vmatpush1.msra.mxu0 %v415
  %1053 = vmatprep.subr.mxu0 %v420
  %1054 = vmatpush1.msra.mxu0 %v419
  %1055 = vmatprep.subr.mxu0 %v424
  %1056 = vmatpush1.msra.mxu0 %v423
  %1057 = vmatprep.subr.mxu0 %v428
  %1058 = vmatpush1.msra.mxu0 %v427
  %1059 = vmatprep.subr.mxu0 %v432
  %1060 = vmatpush1.msra.mxu0 %v431
  %1061 = vmatprep.subr.mxu0 %v436
  %1062 = vmatpush1.msra.mxu0 %v435
  %1063 = vmatprep.subr.mxu0 %v440
  %1064 = vmatpush1.msra.mxu0 %v439
  %1065 = vmatprep.subr.mxu0 %v444
  %1066 = vmatpush1.msra.mxu0 %v443
  %1067 = vmatprep.subr.mxu0 %v448
  %1068 = vmatpush1.msra.mxu0 %v447
  %1069 = vmatprep.subr.mxu0 %v452
  %1070 = vmatpush1.msra.mxu0 %v451
  %1071 = vmatprep.subr.mxu0 %v456
  %1072 = vmatpush1.msra.mxu0 %v455
  %1073 = vmatprep.subr.mxu0 %v460
  %1074 = vmatpush1.msra.mxu0 %v459
  %1075 = vmatprep.subr.mxu0 %v464
  %1076 = vmatpush1.msra.mxu0 %v463
  %1077 = vmatprep.subr.mxu0 %v468
  %1078 = vmatpush1.msra.mxu0 %v467
  %1079 = vmatprep.subr.mxu0 %v472
  %1080 = vmatpush1.msra.mxu0 %v471
  %1081 = vmatprep.subr.mxu0 0.0
  %1082 = vmatpush1.msra.mxu0 0.0
  %1083 = vmatprep.subr.mxu0 0.0
  %1084 = vmatpush1.msra.mxu0 0.0
  %1085 = vmatprep.subr.mxu0 0.0
  %1086 = vmatpush1.msra.mxu0 0.0
  %1087 = vmatprep.subr.mxu0 0.0
  %1088 = vmatpush1.msra.mxu0 0.0
  %1089 = vmatprep.subr.mxu0 0.0
  %1090 = vmatpush1.msra.mxu0 0.0
  %1091 = vmatprep.subr.mxu0 0.0
  %1092 = vmatpush1.msra.mxu0 0.0
  %1093 = vmatprep.subr.mxu0 0.0
  %1094 = vmatpush1.msra.mxu0 0.0
  %1095 = vmatprep.subr.mxu0 0.0
  %1096 = vmatpush1.msra.mxu0 0.0
  %1097 = vmatprep.subr.mxu0 0.0
  %1098 = vmatpush1.msra.mxu0 0.0
  %1099 = vmatprep.subr.mxu0 0.0
  %1100 = vmatpush1.msra.mxu0 0.0
  %1101 = vmatprep.subr.mxu0 0.0
  %1102 = vmatpush1.msra.mxu0 0.0
  %1103 = vmatprep.subr.mxu0 0.0
  %1104 = vmatpush1.msra.mxu0 0.0
  %1105 = vmatprep.subr.mxu0 0.0
  %1106 = vmatpush1.msra.mxu0 0.0
  %1107 = vmatprep.subr.mxu0 0.0
  %1108 = vmatpush1.msra.mxu0 0.0
  %1109 = vmatprep.subr.mxu0 0.0
  %1110 = vmatpush1.msra.mxu0 0.0
  %1111 = vmatprep.subr.mxu0 0.0
  %1112 = vmatpush1.msra.mxu0 0.0
  %1113 = vmatprep.mubr.f32.mxu0 0.0
  %1114 = vmatmul.mubr.f32.gmra.mrb[0].mxu0 %v972
  %v1115 = vpop.f32.mrb[0].mxu0
  %v1116 = vadd.f32 %v976, %v1115
  %v1117 = vpop.f32.mrb[0].mxu0
  %v1118 = vadd.f32 %v977, %v1117
  %1119 = vdwg.mxu0
  %v1120 = vxor.u32 %v1045, 2147483648
  %v1121 = vxor.u32 %v1047, 2147483648
  %v1122 = vmul.f32 %v1120, 1.442695
  %v1123 = vpow.pop %v1122
  %v1124 = vmul.f32 %v1121, 1.442695
  %v1125 = vpow.pop %v1124
  %v1126 = vadd.f32 %v1123, 1.0
  %v1127 = vadd.f32 %v1125, 1.0
  %v1128 = vrcp.pop %v1126
  %v1129 = vmul.f32 1.0, %v1128
  %v1130 = vrcp.pop %v1127
  %v1131 = vmul.f32 1.0, %v1130
  %v1132 = vmul.f32 %v1129, %v1116
  %v1133 = vadd.f32 %v1118, %v1132
  %v1134 = vtanh.pop %v1133
  %v1135 = vsub.f32 1.0, %v1131
  %v1136 = vmul.f32 %v1135, %v1134
  %v1137 = vmul.f32 %v1131, %v972
  %v1138 = vadd.f32 %v1136, %v1137
  %1139 = vst [vmem:[#allocation3 + $0x10] sm:$0xff] %v1138
  %v1140 = vld [vmem:[#allocation2 + $0x80] sm:$0xff]
  %v1141 = vld [vmem:[#allocation2 + $0x88] sm:$0xff]
  %v1142 = vld [vmem:[#allocation2 + $0x90] sm:$0xff]
  %v1143 = vld [vmem:[#allocation2 + $0x98] sm:$0xff]
  %1144 = vmatprep.subr.mxu0 %v410
  %1145 = vmatpush1.msra.mxu0 %v409
  %1146 = vmatprep.subr.mxu0 %v414
  %1147 = vmatpush1.msra.mxu0 %v413
  %1148 = vmatprep.subr.mxu0 %v418
  %1149 = vmatpush1.msra.mxu0 %v417
  %1150 = vmatprep.subr.mxu0 %v422
  %1151 = vmatpush1.msra.mxu0 %v421
  %1152 = vmatprep.subr.mxu0 %v426
  %1153 = vmatpush1.msra.mxu0 %v425
  %1154 = vmatprep.subr.mxu0 %v430
  %1155 = vmatpush1.msra.mxu0 %v429
  %1156 = vmatprep.subr.mxu0 %v434
  %1157 = vmatpush1.msra.mxu0 %v433
  %1158 = vmatprep.subr.mxu0 %v438
  %1159 = vmatpush1.msra.mxu0 %v437
  %1160 = vmatprep.subr.mxu0 %v442
  %1161 = vmatpush1.msra.mxu0 %v441
  %1162 = vmatprep.subr.mxu0 %v446
  %1163 = vmatpush1.msra.mxu0 %v445
  %1164 = vmatprep.subr.mxu0 %v450
  %1165 = vmatpush1.msra.mxu0 %v449
  %1166 = vmatprep.subr.mxu0 %v454
  %1167 = vmatpush1.msra.mxu0 %v453
  %1168 = vmatprep.subr.mxu0 %v458
  %1169 = vmatpush1.msra.mxu0 %v457
  %1170 = vmatprep.subr.mxu0 %v462
  %1171 = vmatpush1.msra.mxu0 %v461
  %1172 = vmatprep.subr.mxu0 %v466
  %1173 = vmatpush1.msra.mxu0 %v465
  %1174 = vmatprep.subr.mxu0 %v470
  %1175 = vmatpush1.msra.mxu0 %v469
  %1176 = vmatprep.subr.mxu0 0.0
  %1177 = vmatpush1.msra.mxu0 0.0
  %1178 = vmatprep.subr.mxu0 0.0
  %1179 = vmatpush1.msra.mxu0 0.0
  %1180 = vmatprep.subr.mxu0 0.0
  %1181 = vmatpush1.msra.mxu0 0.0
  %1182 = vmatprep.subr.mxu0 0.0
  %1183 = vmatpush1.msra.mxu0 0.0
  %1184 = vmatprep.subr.mxu0 0.0
  %1185 = vmatpush1.msra.mxu0 0.0
  %1186 = vmatprep.subr.mxu0 0.0
  %1187 = vmatpush1.msra.mxu0 0.0
  %1188 = vmatprep.subr.mxu0 0.0
  %1189 = vmatpush1.msra.mxu0 0.0
  %1190 = vmatprep.subr.mxu0 0.0
  %1191 = vmatpush1.msra.mxu0 0.0
  %1192 = vmatprep.subr.mxu0 0.0
  %1193 = vmatpush1.msra.mxu0 0.0
  %1194 = vmatprep.subr.mxu0 0.0
  %1195 = vmatpush1.msra.mxu0 0.0
  %1196 = vmatprep.subr.mxu0 0.0
  %1197 = vmatpush1.msra.mxu0 0.0
  %1198 = vmatprep.subr.mxu0 0.0
  %1199 = vmatpush1.msra.mxu0 0.0
  %1200 = vmatprep.subr.mxu0 0.0
  %1201 = vmatpush1.msra.mxu0 0.0
  %1202 = vmatprep.subr.mxu0 0.0
  %1203 = vmatpush1.msra.mxu0 0.0
  %1204 = vmatprep.subr.mxu0 0.0
  %1205 = vmatpush1.msra.mxu0 0.0
  %1206 = vmatprep.subr.mxu0 0.0
  %1207 = vmatpush1.msra.mxu0 0.0
  %1208 = vmatprep.mubr.f32.mxu0 0.0
  %1209 = vmatmul.mubr.f32.gmra.mrb[0].mxu0 %v1138
  %v1210 = vpop.f32.mrb[0].mxu0
  %v1211 = vadd.f32 %v1140, %v1210
  %v1212 = vpop.f32.mrb[0].mxu0
  %v1213 = vadd.f32 %v1141, %v1212
  %1214 = vdwg.mxu0
  %1215 = vmatprep.subr.mxu0 %v412
  %1216 = vmatpush1.msra.mxu0 %v411
  %1217 = vmatprep.subr.mxu0 %v416
  %1218 = vmatpush1.msra.mxu0 %v415
  %1219 = vmatprep.subr.mxu0 %v420
  %1220 = vmatpush1.msra.mxu0 %v419
  %1221 = vmatprep.subr.mxu0 %v424
  %1222 = vmatpush1.msra.mxu0 %v423
  %1223 = vmatprep.subr.mxu0 %v428
  %1224 = vmatpush1.msra.mxu0 %v427
  %1225 = vmatprep.subr.mxu0 %v432
  %1226 = vmatpush1.msra.mxu0 %v431
  %1227 = vmatprep.subr.mxu0 %v436
  %1228 = vmatpush1.msra.mxu0 %v435
  %1229 = vmatprep.subr.mxu0 %v440
  %1230 = vmatpush1.msra.mxu0 %v439
  %1231 = vmatprep.subr.mxu0 %v444
  %1232 = vmatpush1.msra.mxu0 %v443
  %1233 = vmatprep.subr.mxu0 %v448
  %1234 = vmatpush1.msra.mxu0 %v447
  %1235 = vmatprep.subr.mxu0 %v452
  %1236 = vmatpush1.msra.mxu0 %v451
  %1237 = vmatprep.subr.mxu0 %v456
  %1238 = vmatpush1.msra.mxu0 %v455
  %1239 = vmatprep.subr.mxu0 %v460
  %1240 = vmatpush1.msra.mxu0 %v459
  %1241 = vmatprep.subr.mxu0 %v464
  %1242 = vmatpush1.msra.mxu0 %v463
  %1243 = vmatprep.subr.mxu0 %v468
  %1244 = vmatpush1.msra.mxu0 %v467
  %1245 = vmatprep.subr.mxu0 %v472
  %1246 = vmatpush1.msra.mxu0 %v471
  %1247 = vmatprep.subr.mxu0 0.0
  %1248 = vmatpush1.msra.mxu0 0.0
  %1249 = vmatprep.subr.mxu0 0.0
  %1250 = vmatpush1.msra.mxu0 0.0
  %1251 = vmatprep.subr.mxu0 0.0
  %1252 = vmatpush1.msra.mxu0 0.0
  %1253 = vmatprep.subr.mxu0 0.0
  %1254 = vmatpush1.msra.mxu0 0.0
  %1255 = vmatprep.subr.mxu0 0.0
  %1256 = vmatpush1.msra.mxu0 0.0
  %1257 = vmatprep.subr.mxu0 0.0
  %1258 = vmatpush1.msra.mxu0 0.0
  %1259 = vmatprep.subr.mxu0 0.0
  %1260 = vmatpush1.msra.mxu0 0.0
  %1261 = vmatprep.subr.mxu0 0.0
  %1262 = vmatpush1.msra.mxu0 0.0
  %1263 = vmatprep.subr.mxu0 0.0
  %1264 = vmatpush1.msra.mxu0 0.0
  %1265 = vmatprep.subr.mxu0 0.0
  %1266 = vmatpush1.msra.mxu0 0.0
  %1267 = vmatprep.subr.mxu0 0.0
  %1268 = vmatpush1.msra.mxu0 0.0
  %1269 = vmatprep.subr.mxu0 0.0
  %1270 = vmatpush1.msra.mxu0 0.0
  %1271 = vmatprep.subr.mxu0 0.0
  %1272 = vmatpush1.msra.mxu0 0.0
  %1273 = vmatprep.subr.mxu0 0.0
  %1274 = vmatpush1.msra.mxu0 0.0
  %1275 = vmatprep.subr.mxu0 0.0
  %1276 = vmatpush1.msra.mxu0 0.0
  %1277 = vmatprep.subr.mxu0 0.0
  %1278 = vmatpush1.msra.mxu0 0.0
  %1279 = vmatprep.mubr.f32.mxu0 0.0
  %1280 = vmatmul.mubr.f32.gmra.mrb[0].mxu0 %v1138
  %v1281 = vpop.f32.mrb[0].mxu0
  %v1282 = vadd.f32 %v1142, %v1281
  %v1283 = vpop.f32.mrb[0].mxu0
  %v1284 = vadd.f32 %v1143, %v1283
  %1285 = vdwg.mxu0
  %v1286 = vxor.u32 %v1211, 2147483648
  %v1287 = vxor.u32 %v1213, 2147483648
  %v1288 = vmul.f32 %v1286, 1.442695
  %v1289 = vpow.pop %v1288
  %v1290 = vmul.f32 %v1287, 1.442695
  %v1291 = vpow.pop %v1290
  %v1292 = vadd.f32 %v1289, 1.0
  %v1293 = vadd.f32 %v1291, 1.0
  %v1294 = vrcp.pop %v1292
  %v1295 = vmul.f32 1.0, %v1294
  %v1296 = vrcp.pop %v1293
  %v1297 = vmul.f32 1.0, %v1296
  %v1298 = vmul.f32 %v1295, %v1282
  %v1299 = vadd.f32 %v1284, %v1298
  %v1300 = vtanh.pop %v1299
  %v1301 = vsub.f32 1.0, %v1297
  %v1302 = vmul.f32 %v1301, %v1300
  %v1303 = vmul.f32 %v1297, %v1138
  %v1304 = vadd.f32 %v1302, %v1303
  %1305 = vst [vmem:[#allocation3 + $0x18] sm:$0xff] %v1304
  %v1306 = vld [vmem:[#allocation2 + $0xa0] sm:$0xff]
  %v1307 = vld [vmem:[#allocation2 + $0xa8] sm:$0xff]
  %v1308 = vld [vmem:[#allocation2 + $0xb0] sm:$0xff]
  %v1309 = vld [vmem:[#allocation2 + $0xb8] sm:$0xff]
  %1310 = vmatprep.subr.mxu0 %v410
  %1311 = vmatpush1.msra.mxu0 %v409
  %1312 = vmatprep.subr.mxu0 %v414
  %1313 = vmatpush1.msra.mxu0 %v413
  %1314 = vmatprep.subr.mxu0 %v418
  %1315 = vmatpush1.msra.mxu0 %v417
  %1316 = vmatprep.subr.mxu0 %v422
  %1317 = vmatpush1.msra.mxu0 %v421
  %1318 = vmatprep.subr.mxu0 %v426
  %1319 = vmatpush1.msra.mxu0 %v425
  %1320 = vmatprep.subr.mxu0 %v430
  %1321 = vmatpush1.msra.mxu0 %v429
  %1322 = vmatprep.subr.mxu0 %v434
  %1323 = vmatpush1.msra.mxu0 %v433
  %1324 = vmatprep.subr.mxu0 %v438
  %1325 = vmatpush1.msra.mxu0 %v437
  %1326 = vmatprep.subr.mxu0 %v442
  %1327 = vmatpush1.msra.mxu0 %v441
  %1328 = vmatprep.subr.mxu0 %v446
  %1329 = vmatpush1.msra.mxu0 %v445
  %1330 = vmatprep.subr.mxu0 %v450
  %1331 = vmatpush1.msra.mxu0 %v449
  %1332 = vmatprep.subr.mxu0 %v454
  %1333 = vmatpush1.msra.mxu0 %v453
  %1334 = vmatprep.subr.mxu0 %v458
  %1335 = vmatpush1.msra.mxu0 %v457
  %1336 = vmatprep.subr.mxu0 %v462
  %1337 = vmatpush1.msra.mxu0 %v461
  %1338 = vmatprep.subr.mxu0 %v466
  %1339 = vmatpush1.msra.mxu0 %v465
  %1340 = vmatprep.subr.mxu0 %v470
  %1341 = vmatpush1.msra.mxu0 %v469
  %1342 = vmatprep.subr.mxu0 0.0
  %1343 = vmatpush1.msra.mxu0 0.0
  %1344 = vmatprep.subr.mxu0 0.0
  %1345 = vmatpush1.msra.mxu0 0.0
  %1346 = vmatprep.subr.mxu0 0.0
  %1347 = vmatpush1.msra.mxu0 0.0
  %1348 = vmatprep.subr.mxu0 0.0
  %1349 = vmatpush1.msra.mxu0 0.0
  %1350 = vmatprep.subr.mxu0 0.0
  %1351 = vmatpush1.msra.mxu0 0.0
  %1352 = vmatprep.subr.mxu0 0.0
  %1353 = vmatpush1.msra.mxu0 0.0
  %1354 = vmatprep.subr.mxu0 0.0
  %1355 = vmatpush1.msra.mxu0 0.0
  %1356 = vmatprep.subr.mxu0 0.0
  %1357 = vmatpush1.msra.mxu0 0.0
  %1358 = vmatprep.subr.mxu0 0.0
  %1359 = vmatpush1.msra.mxu0 0.0
  %1360 = vmatprep.subr.mxu0 0.0
  %1361 = vmatpush1.msra.mxu0 0.0
  %1362 = vmatprep.subr.mxu0 0.0
  %1363 = vmatpush1.msra.mxu0 0.0
  %1364 = vmatprep.subr.mxu0 0.0
  %1365 = vmatpush1.msra.mxu0 0.0
  %1366 = vmatprep.subr.mxu0 0.0
  %1367 = vmatpush1.msra.mxu0 0.0
  %1368 = vmatprep.subr.mxu0 0.0
  %1369 = vmatpush1.msra.mxu0 0.0
  %1370 = vmatprep.subr.mxu0 0.0
  %1371 = vmatpush1.msra.mxu0 0.0
  %1372 = vmatprep.subr.mxu0 0.0
  %1373 = vmatpush1.msra.mxu0 0.0
  %1374 = vmatprep.mubr.f32.mxu0 0.0
  %1375 = vmatmul.mubr.f32.gmra.mrb[0].mxu0 %v1304
  %v1376 = vpop.f32.mrb[0].mxu0
  %v1377 = vadd.f32 %v1306, %v1376
  %v1378 = vpop.f32.mrb[0].mxu0
  %v1379 = vadd.f32 %v1307, %v1378
  %1380 = vdwg.mxu0
  %1381 = vmatprep.subr.mxu0 %v412
  %1382 = vmatpush1.msra.mxu0 %v411
  %1383 = vmatprep.subr.mxu0 %v416
  %1384 = vmatpush1.msra.mxu0 %v415
  %1385 = vmatprep.subr.mxu0 %v420
  %1386 = vmatpush1.msra.mxu0 %v419
  %1387 = vmatprep.subr.mxu0 %v424
  %1388 = vmatpush1.msra.mxu0 %v423
  %1389 = vmatprep.subr.mxu0 %v428
  %1390 = vmatpush1.msra.mxu0 %v427
  %1391 = vmatprep.subr.mxu0 %v432
  %1392 = vmatpush1.msra.mxu0 %v431
  %1393 = vmatprep.subr.mxu0 %v436
  %1394 = vmatpush1.msra.mxu0 %v435
  %1395 = vmatprep.subr.mxu0 %v440
  %1396 = vmatpush1.msra.mxu0 %v439
  %1397 = vmatprep.subr.mxu0 %v444
  %1398 = vmatpush1.msra.mxu0 %v443
  %1399 = vmatprep.subr.mxu0 %v448
  %1400 = vmatpush1.msra.mxu0 %v447
  %1401 = vmatprep.subr.mxu0 %v452
  %1402 = vmatpush1.msra.mxu0 %v451
  %1403 = vmatprep.subr.mxu0 %v456
  %1404 = vmatpush1.msra.mxu0 %v455
  %1405 = vmatprep.subr.mxu0 %v460
  %1406 = vmatpush1.msra.mxu0 %v459
  %1407 = vmatprep.subr.mxu0 %v464
  %1408 = vmatpush1.msra.mxu0 %v463
  %1409 = vmatprep.subr.mxu0 %v468
  %1410 = vmatpush1.msra.mxu0 %v467
  %1411 = vmatprep.subr.mxu0 %v472
  %1412 = vmatpush1.msra.mxu0 %v471
  %1413 = vmatprep.subr.mxu0 0.0
  %1414 = vmatpush1.msra.mxu0 0.0
  %1415 = vmatprep.subr.mxu0 0.0
  %1416 = vmatpush1.msra.mxu0 0.0
  %1417 = vmatprep.subr.mxu0 0.0
  %1418 = vmatpush1.msra.mxu0 0.0
  %1419 = vmatprep.subr.mxu0 0.0
  %1420 = vmatpush1.msra.mxu0 0.0
  %1421 = vmatprep.subr.mxu0 0.0
  %1422 = vmatpush1.msra.mxu0 0.0
  %1423 = vmatprep.subr.mxu0 0.0
  %1424 = vmatpush1.msra.mxu0 0.0
  %1425 = vmatprep.subr.mxu0 0.0
  %1426 = vmatpush1.msra.mxu0 0.0
  %1427 = vmatprep.subr.mxu0 0.0
  %1428 = vmatpush1.msra.mxu0 0.0
  %1429 = vmatprep.subr.mxu0 0.0
  %1430 = vmatpush1.msra.mxu0 0.0
  %1431 = vmatprep.subr.mxu0 0.0
  %1432 = vmatpush1.msra.mxu0 0.0
  %1433 = vmatprep.subr.mxu0 0.0
  %1434 = vmatpush1.msra.mxu0 0.0
  %1435 = vmatprep.subr.mxu0 0.0
  %1436 = vmatpush1.msra.mxu0 0.0
  %1437 = vmatprep.subr.mxu0 0.0
  %1438 = vmatpush1.msra.mxu0 0.0
  %1439 = vmatprep.subr.mxu0 0.0
  %1440 = vmatpush1.msra.mxu0 0.0
  %1441 = vmatprep.subr.mxu0 0.0
  %1442 = vmatpush1.msra.mxu0 0.0
  %1443 = vmatprep.subr.mxu0 0.0
  %1444 = vmatpush1.msra.mxu0 0.0
  %1445 = vmatprep.mubr.f32.mxu0 0.0
  %1446 = vmatmul.mubr.f32.gmra.mrb[0].mxu0 %v1304
  %v1447 = vpop.f32.mrb[0].mxu0
  %v1448 = vadd.f32 %v1308, %v1447
  %v1449 = vpop.f32.mrb[0].mxu0
  %v1450 = vadd.f32 %v1309, %v1449
  %1451 = vdwg.mxu0
  %v1452 = vxor.u32 %v1377, 2147483648
  %v1453 = vxor.u32 %v1379, 2147483648
  %v1454 = vmul.f32 %v1452, 1.442695
  %v1455 = vpow.pop %v1454
  %v1456 = vmul.f32 %v1453, 1.442695
  %v1457 = vpow.pop %v1456
  %v1458 = vadd.f32 %v1455, 1.0
  %v1459 = vadd.f32 %v1457, 1.0
  %v1460 = vrcp.pop %v1458
  %v1461 = vmul.f32 1.0, %v1460
  %v1462 = vrcp.pop %v1459
  %v1463 = vmul.f32 1.0, %v1462
  %v1464 = vmul.f32 %v1461, %v1448
  %v1465 = vadd.f32 %v1450, %v1464
  %v1466 = vtanh.pop %v1465
  %v1467 = vsub.f32 1.0, %v1463
  %v1468 = vmul.f32 %v1467, %v1466
  %v1469 = vmul.f32 %v1463, %v1304
  %v1470 = vadd.f32 %v1468, %v1469
  %1471 = vst [vmem:[#allocation3 + $0x20] sm:$0xff] %v1470
  %v1472 = vld [vmem:[#allocation2 + $0xc0] sm:$0xff]
  %v1473 = vld [vmem:[#allocation2 + $0xc8] sm:$0xff]
  %v1474 = vld [vmem:[#allocation2 + $0xd0] sm:$0xff]
  %v1475 = vld [vmem:[#allocation2 + $0xd8] sm:$0xff]
  %1476 = vmatprep.subr.mxu0 %v410
  %1477 = vmatpush1.msra.mxu0 %v409
  %1478 = vmatprep.subr.mxu0 %v414
  %1479 = vmatpush1.msra.mxu0 %v413
  %1480 = vmatprep.subr.mxu0 %v418
  %1481 = vmatpush1.msra.mxu0 %v417
  %1482 = vmatprep.subr.mxu0 %v422
  %1483 = vmatpush1.msra.mxu0 %v421
  %1484 = vmatprep.subr.mxu0 %v426
  %1485 = vmatpush1.msra.mxu0 %v425
  %1486 = vmatprep.subr.mxu0 %v430
  %1487 = vmatpush1.msra.mxu0 %v429
  %1488 = vmatprep.subr.mxu0 %v434
  %1489 = vmatpush1.msra.mxu0 %v433
  %1490 = vmatprep.subr.mxu0 %v438
  %1491 = vmatpush1.msra.mxu0 %v437
  %1492 = vmatprep.subr.mxu0 %v442
  %1493 = vmatpush1.msra.mxu0 %v441
  %1494 = vmatprep.subr.mxu0 %v446
  %1495 = vmatpush1.msra.mxu0 %v445
  %1496 = vmatprep.subr.mxu0 %v450
  %1497 = vmatpush1.msra.mxu0 %v449
  %1498 = vmatprep.subr.mxu0 %v454
  %1499 = vmatpush1.msra.mxu0 %v453
  %1500 = vmatprep.subr.mxu0 %v458
  %1501 = vmatpush1.msra.mxu0 %v457
  %1502 = vmatprep.subr.mxu0 %v462
  %1503 = vmatpush1.msra.mxu0 %v461
  %1504 = vmatprep.subr.mxu0 %v466
  %1505 = vmatpush1.msra.mxu0 %v465
  %1506 = vmatprep.subr.mxu0 %v470
  %1507 = vmatpush1.msra.mxu0 %v469
  %1508 = vmatprep.subr.mxu0 0.0
  %1509 = vmatpush1.msra.mxu0 0.0
  %1510 = vmatprep.subr.mxu0 0.0
  %1511 = vmatpush1.msra.mxu0 0.0
  %1512 = vmatprep.subr.mxu0 0.0
  %1513 = vmatpush1.msra.mxu0 0.0
  %1514 = vmatprep.subr.mxu0 0.0
  %1515 = vmatpush1.msra.mxu0 0.0
  %1516 = vmatprep.subr.mxu0 0.0
  %1517 = vmatpush1.msra.mxu0 0.0
  %1518 = vmatprep.subr.mxu0 0.0
  %1519 = vmatpush1.msra.mxu0 0.0
  %1520 = vmatprep.subr.mxu0 0.0
  %1521 = vmatpush1.msra.mxu0 0.0
  %1522 = vmatprep.subr.mxu0 0.0
  %1523 = vmatpush1.msra.mxu0 0.0
  %1524 = vmatprep.subr.mxu0 0.0
  %1525 = vmatpush1.msra.mxu0 0.0
  %1526 = vmatprep.subr.mxu0 0.0
  %1527 = vmatpush1.msra.mxu0 0.0
  %1528 = vmatprep.subr.mxu0 0.0
  %1529 = vmatpush1.msra.mxu0 0.0
  %1530 = vmatprep.subr.mxu0 0.0
  %1531 = vmatpush1.msra.mxu0 0.0
  %1532 = vmatprep.subr.mxu0 0.0
  %1533 = vmatpush1.msra.mxu0 0.0
  %1534 = vmatprep.subr.mxu0 0.0
  %1535 = vmatpush1.msra.mxu0 0.0
  %1536 = vmatprep.subr.mxu0 0.0
  %1537 = vmatpush1.msra.mxu0 0.0
  %1538 = vmatprep.subr.mxu0 0.0
  %1539 = vmatpush1.msra.mxu0 0.0
  %1540 = vmatprep.mubr.f32.mxu0 0.0
  %1541 = vmatmul.mubr.f32.gmra.mrb[0].mxu0 %v1470
  %v1542 = vpop.f32.mrb[0].mxu0
  %v1543 = vadd.f32 %v1472, %v1542
  %v1544 = vpop.f32.mrb[0].mxu0
  %v1545 = vadd.f32 %v1473, %v1544
  %1546 = vdwg.mxu0
  %1547 = vmatprep.subr.mxu0 %v412
  %1548 = vmatpush1.msra.mxu0 %v411
  %1549 = vmatprep.subr.mxu0 %v416
  %1550 = vmatpush1.msra.mxu0 %v415
  %1551 = vmatprep.subr.mxu0 %v420
  %1552 = vmatpush1.msra.mxu0 %v419
  %1553 = vmatprep.subr.mxu0 %v424
  %1554 = vmatpush1.msra.mxu0 %v423
  %1555 = vmatprep.subr.mxu0 %v428
  %1556 = vmatpush1.msra.mxu0 %v427
  %1557 = vmatprep.subr.mxu0 %v432
  %1558 = vmatpush1.msra.mxu0 %v431
  %1559 = vmatprep.subr.mxu0 %v436
  %1560 = vmatpush1.msra.mxu0 %v435
  %1561 = vmatprep.subr.mxu0 %v440
  %1562 = vmatpush1.msra.mxu0 %v439
  %1563 = vmatprep.subr.mxu0 %v444
  %1564 = vmatpush1.msra.mxu0 %v443
  %1565 = vmatprep.subr.mxu0 %v448
  %1566 = vmatpush1.msra.mxu0 %v447
  %1567 = vmatprep.subr.mxu0 %v452
  %1568 = vmatpush1.msra.mxu0 %v451
  %1569 = vmatprep.subr.mxu0 %v456
  %1570 = vmatpush1.msra.mxu0 %v455
  %1571 = vmatprep.subr.mxu0 %v460
  %1572 = vmatpush1.msra.mxu0 %v459
  %1573 = vmatprep.subr.mxu0 %v464
  %1574 = vmatpush1.msra.mxu0 %v463
  %1575 = vmatprep.subr.mxu0 %v468
  %1576 = vmatpush1.msra.mxu0 %v467
  %1577 = vmatprep.subr.mxu0 %v472
  %1578 = vmatpush1.msra.mxu0 %v471
  %1579 = vmatprep.subr.mxu0 0.0
  %1580 = vmatpush1.msra.mxu0 0.0
  %1581 = vmatprep.subr.mxu0 0.0
  %1582 = vmatpush1.msra.mxu0 0.0
  %1583 = vmatprep.subr.mxu0 0.0
  %1584 = vmatpush1.msra.mxu0 0.0
  %1585 = vmatprep.subr.mxu0 0.0
  %1586 = vmatpush1.msra.mxu0 0.0
  %1587 = vmatprep.subr.mxu0 0.0
  %1588 = vmatpush1.msra.mxu0 0.0
  %1589 = vmatprep.subr.mxu0 0.0
  %1590 = vmatpush1.msra.mxu0 0.0
  %1591 = vmatprep.subr.mxu0 0.0
  %1592 = vmatpush1.msra.mxu0 0.0
  %1593 = vmatprep.subr.mxu0 0.0
  %1594 = vmatpush1.msra.mxu0 0.0
  %1595 = vmatprep.subr.mxu0 0.0
  %1596 = vmatpush1.msra.mxu0 0.0
  %1597 = vmatprep.subr.mxu0 0.0
  %1598 = vmatpush1.msra.mxu0 0.0
  %1599 = vmatprep.subr.mxu0 0.0
  %1600 = vmatpush1.msra.mxu0 0.0
  %1601 = vmatprep.subr.mxu0 0.0
  %1602 = vmatpush1.msra.mxu0 0.0
  %1603 = vmatprep.subr.mxu0 0.0
  %1604 = vmatpush1.msra.mxu0 0.0
  %1605 = vmatprep.subr.mxu0 0.0
  %1606 = vmatpush1.msra.mxu0 0.0
  %1607 = vmatprep.subr.mxu0 0.0
  %1608 = vmatpush1.msra.mxu0 0.0
  %1609 = vmatprep.subr.mxu0 0.0
  %1610 = vmatpush1.msra.mxu0 0.0
  %1611 = vmatprep.mubr.f32.mxu0 0.0
  %1612 = vmatmul.mubr.f32.gmra.mrb[0].mxu0 %v1470
  %v1613 = vpop.f32.mrb[0].mxu0
  %v1614 = vadd.f32 %v1474, %v1613
  %v1615 = vpop.f32.mrb[0].mxu0
  %v1616 = vadd.f32 %v1475, %v1615
  %1617 = vdwg.mxu0
  %v1618 = vxor.u32 %v1543, 2147483648
  %v1619 = vxor.u32 %v1545, 2147483648
  %v1620 = vmul.f32 %v1618, 1.442695
  %v1621 = vpow.pop %v1620
  %v1622 = vmul.f32 %v1619, 1.442695
  %v1623 = vpow.pop %v1622
  %v1624 = vadd.f32 %v1621, 1.0
  %v1625 = vadd.f32 %v1623, 1.0
  %v1626 = vrcp.pop %v1624
  %v1627 = vmul.f32 1.0, %v1626
  %v1628 = vrcp.pop %v1625
  %v1629 = vmul.f32 1.0, %v1628
  %v1630 = vmul.f32 %v1627, %v1614
  %v1631 = vadd.f32 %v1616, %v1630
  %v1632 = vtanh.pop %v1631
  %v1633 = vsub.f32 1.0, %v1629
  %v1634 = vmul.f32 %v1633, %v1632
  %v1635 = vmul.f32 %v1629, %v1470
  %v1636 = vadd.f32 %v1634, %v1635
  %1637 = vst [vmem:[#allocation3 + $0x28] sm:$0xff] %v1636
  %v1638 = vld [vmem:[#allocation2 + $0xe0] sm:$0xff]
  %v1639 = vld [vmem:[#allocation2 + $0xe8] sm:$0xff]
  %v1640 = vld [vmem:[#allocation2 + $0xf0] sm:$0xff]
  %v1641 = vld [vmem:[#allocation2 + $0xf8] sm:$0xff]
  %1642 = vmatprep.subr.mxu0 %v410
  %1643 = vmatpush1.msra.mxu0 %v409
  %1644 = vmatprep.subr.mxu0 %v414
  %1645 = vmatpush1.msra.mxu0 %v413
  %1646 = vmatprep.subr.mxu0 %v418
  %1647 = vmatpush1.msra.mxu0 %v417
  %1648 = vmatprep.subr.mxu0 %v422
  %1649 = vmatpush1.msra.mxu0 %v421
  %1650 = vmatprep.subr.mxu0 %v426
  %1651 = vmatpush1.msra.mxu0 %v425
  %1652 = vmatprep.subr.mxu0 %v430
  %1653 = vmatpush1.msra.mxu0 %v429
  %1654 = vmatprep.subr.mxu0 %v434
  %1655 = vmatpush1.msra.mxu0 %v433
  %1656 = vmatprep.subr.mxu0 %v438
  %1657 = vmatpush1.msra.mxu0 %v437
  %1658 = vmatprep.subr.mxu0 %v442
  %1659 = vmatpush1.msra.mxu0 %v441
  %1660 = vmatprep.subr.mxu0 %v446
  %1661 = vmatpush1.msra.mxu0 %v445
  %1662 = vmatprep.subr.mxu0 %v450
  %1663 = vmatpush1.msra.mxu0 %v449
  %1664 = vmatprep.subr.mxu0 %v454
  %1665 = vmatpush1.msra.mxu0 %v453
  %1666 = vmatprep.subr.mxu0 %v458
  %1667 = vmatpush1.msra.mxu0 %v457
  %1668 = vmatprep.subr.mxu0 %v462
  %1669 = vmatpush1.msra.mxu0 %v461
  %1670 = vmatprep.subr.mxu0 %v466
  %1671 = vmatpush1.msra.mxu0 %v465
  %1672 = vmatprep.subr.mxu0 %v470
  %1673 = vmatpush1.msra.mxu0 %v469
  %1674 = vmatprep.subr.mxu0 0.0
  %1675 = vmatpush1.msra.mxu0 0.0
  %1676 = vmatprep.subr.mxu0 0.0
  %1677 = vmatpush1.msra.mxu0 0.0
  %1678 = vmatprep.subr.mxu0 0.0
  %1679 = vmatpush1.msra.mxu0 0.0
  %1680 = vmatprep.subr.mxu0 0.0
  %1681 = vmatpush1.msra.mxu0 0.0
  %1682 = vmatprep.subr.mxu0 0.0
  %1683 = vmatpush1.msra.mxu0 0.0
  %1684 = vmatprep.subr.mxu0 0.0
  %1685 = vmatpush1.msra.mxu0 0.0
  %1686 = vmatprep.subr.mxu0 0.0
  %1687 = vmatpush1.msra.mxu0 0.0
  %1688 = vmatprep.subr.mxu0 0.0
  %1689 = vmatpush1.msra.mxu0 0.0
  %1690 = vmatprep.subr.mxu0 0.0
  %1691 = vmatpush1.msra.mxu0 0.0
  %1692 = vmatprep.subr.mxu0 0.0
  %1693 = vmatpush1.msra.mxu0 0.0
  %1694 = vmatprep.subr.mxu0 0.0
  %1695 = vmatpush1.msra.mxu0 0.0
  %1696 = vmatprep.subr.mxu0 0.0
  %1697 = vmatpush1.msra.mxu0 0.0
  %1698 = vmatprep.subr.mxu0 0.0
  %1699 = vmatpush1.msra.mxu0 0.0
  %1700 = vmatprep.subr.mxu0 0.0
  %1701 = vmatpush1.msra.mxu0 0.0
  %1702 = vmatprep.subr.mxu0 0.0
  %1703 = vmatpush1.msra.mxu0 0.0
  %1704 = vmatprep.subr.mxu0 0.0
  %1705 = vmatpush1.msra.mxu0 0.0
  %1706 = vmatprep.mubr.f32.mxu0 0.0
  %1707 = vmatmul.mubr.f32.gmra.mrb[0].mxu0 %v1636
  %v1708 = vpop.f32.mrb[0].mxu0
  %v1709 = vadd.f32 %v1638, %v1708
  %v1710 = vpop.f32.mrb[0].mxu0
  %v1711 = vadd.f32 %v1639, %v1710
  %1712 = vdwg.mxu0
  %1713 = vmatprep.subr.mxu0 %v412
  %1714 = vmatpush1.msra.mxu0 %v411
  %1715 = vmatprep.subr.mxu0 %v416
  %1716 = vmatpush1.msra.mxu0 %v415
  %1717 = vmatprep.subr.mxu0 %v420
  %1718 = vmatpush1.msra.mxu0 %v419
  %1719 = vmatprep.subr.mxu0 %v424
  %1720 = vmatpush1.msra.mxu0 %v423
  %1721 = vmatprep.subr.mxu0 %v428
  %1722 = vmatpush1.msra.mxu0 %v427
  %1723 = vmatprep.subr.mxu0 %v432
  %1724 = vmatpush1.msra.mxu0 %v431
  %1725 = vmatprep.subr.mxu0 %v436
  %1726 = vmatpush1.msra.mxu0 %v435
  %1727 = vmatprep.subr.mxu0 %v440
  %1728 = vmatpush1.msra.mxu0 %v439
  %1729 = vmatprep.subr.mxu0 %v444
  %1730 = vmatpush1.msra.mxu0 %v443
  %1731 = vmatprep.subr.mxu0 %v448
  %1732 = vmatpush1.msra.mxu0 %v447
  %1733 = vmatprep.subr.mxu0 %v452
  %1734 = vmatpush1.msra.mxu0 %v451
  %1735 = vmatprep.subr.mxu0 %v456
  %1736 = vmatpush1.msra.mxu0 %v455
  %1737 = vmatprep.subr.mxu0 %v460
  %1738 = vmatpush1.msra.mxu0 %v459
  %1739 = vmatprep.subr.mxu0 %v464
  %1740 = vmatpush1.msra.mxu0 %v463
  %1741 = vmatprep.subr.mxu0 %v468
  %1742 = vmatpush1.msra.mxu0 %v467
  %1743 = vmatprep.subr.mxu0 %v472
  %1744 = vmatpush1.msra.mxu0 %v471
  %1745 = vmatprep.subr.mxu0 0.0
  %1746 = vmatpush1.msra.mxu0 0.0
  %1747 = vmatprep.subr.mxu0 0.0
  %1748 = vmatpush1.msra.mxu0 0.0
  %1749 = vmatprep.subr.mxu0 0.0
  %1750 = vmatpush1.msra.mxu0 0.0
  %1751 = vmatprep.subr.mxu0 0.0
  %1752 = vmatpush1.msra.mxu0 0.0
  %1753 = vmatprep.subr.mxu0 0.0
  %1754 = vmatpush1.msra.mxu0 0.0
  %1755 = vmatprep.subr.mxu0 0.0
  %1756 = vmatpush1.msra.mxu0 0.0
  %1757 = vmatprep.subr.mxu0 0.0
  %1758 = vmatpush1.msra.mxu0 0.0
  %1759 = vmatprep.subr.mxu0 0.0
  %1760 = vmatpush1.msra.mxu0 0.0
  %1761 = vmatprep.subr.mxu0 0.0
  %1762 = vmatpush1.msra.mxu0 0.0
  %1763 = vmatprep.subr.mxu0 0.0
  %1764 = vmatpush1.msra.mxu0 0.0
  %1765 = vmatprep.subr.mxu0 0.0
  %1766 = vmatpush1.msra.mxu0 0.0
  %1767 = vmatprep.subr.mxu0 0.0
  %1768 = vmatpush1.msra.mxu0 0.0
  %1769 = vmatprep.subr.mxu0 0.0
  %1770 = vmatpush1.msra.mxu0 0.0
  %1771 = vmatprep.subr.mxu0 0.0
  %1772 = vmatpush1.msra.mxu0 0.0
  %1773 = vmatprep.subr.mxu0 0.0
  %1774 = vmatpush1.msra.mxu0 0.0
  %1775 = vmatprep.subr.mxu0 0.0
  %1776 = vmatpush1.msra.mxu0 0.0
  %1777 = vmatprep.mubr.f32.mxu0 0.0
  %1778 = vmatmul.mubr.f32.gmra.mrb[0].mxu0 %v1636
  %v1779 = vpop.f32.mrb[0].mxu0
  %v1780 = vadd.f32 %v1640, %v1779
  %v1781 = vpop.f32.mrb[0].mxu0
  %v1782 = vadd.f32 %v1641, %v1781
  %1783 = vdwg.mxu0
  %v1784 = vxor.u32 %v1709, 2147483648
  %v1785 = vxor.u32 %v1711, 2147483648
  %v1786 = vmul.f32 %v1784, 1.442695
  %v1787 = vpow.pop %v1786
  %v1788 = vmul.f32 %v1785, 1.442695
  %v1789 = vpow.pop %v1788
  %v1790 = vadd.f32 %v1787, 1.0
  %v1791 = vadd.f32 %v1789, 1.0
  %v1792 = vrcp.pop %v1790
  %v1793 = vmul.f32 1.0, %v1792
  %v1794 = vrcp.pop %v1791
  %v1795 = vmul.f32 1.0, %v1794
  %v1796 = vmul.f32 %v1793, %v1780
  %v1797 = vadd.f32 %v1782, %v1796
  %v1798 = vtanh.pop %v1797
  %v1799 = vsub.f32 1.0, %v1795
  %v1800 = vmul.f32 %v1799, %v1798
  %v1801 = vmul.f32 %v1795, %v1636
  %v1802 = vadd.f32 %v1800, %v1801
  %1803 = vst [vmem:[#allocation3 + $0x30] sm:$0xff] %v1802
  %v1804 = vld [vmem:[#allocation2 + $0x100] sm:$0xff]
  %v1805 = vld [vmem:[#allocation2 + $0x108] sm:$0xff]
  %v1806 = vld [vmem:[#allocation2 + $0x110] sm:$0xff]
  %v1807 = vld [vmem:[#allocation2 + $0x118] sm:$0xff]
  %1808 = vmatprep.subr.mxu0 %v410
  %1809 = vmatpush1.msra.mxu0 %v409
  %1810 = vmatprep.subr.mxu0 %v414
  %1811 = vmatpush1.msra.mxu0 %v413
  %1812 = vmatprep.subr.mxu0 %v418
  %1813 = vmatpush1.msra.mxu0 %v417
  %1814 = vmatprep.subr.mxu0 %v422
  %1815 = vmatpush1.msra.mxu0 %v421
  %1816 = vmatprep.subr.mxu0 %v426
  %1817 = vmatpush1.msra.mxu0 %v425
  %1818 = vmatprep.subr.mxu0 %v430
  %1819 = vmatpush1.msra.mxu0 %v429
  %1820 = vmatprep.subr.mxu0 %v434
  %1821 = vmatpush1.msra.mxu0 %v433
  %1822 = vmatprep.subr.mxu0 %v438
  %1823 = vmatpush1.msra.mxu0 %v437
  %1824 = vmatprep.subr.mxu0 %v442
  %1825 = vmatpush1.msra.mxu0 %v441
  %1826 = vmatprep.subr.mxu0 %v446
  %1827 = vmatpush1.msra.mxu0 %v445
  %1828 = vmatprep.subr.mxu0 %v450
  %1829 = vmatpush1.msra.mxu0 %v449
  %1830 = vmatprep.subr.mxu0 %v454
  %1831 = vmatpush1.msra.mxu0 %v453
  %1832 = vmatprep.subr.mxu0 %v458
  %1833 = vmatpush1.msra.mxu0 %v457
  %1834 = vmatprep.subr.mxu0 %v462
  %1835 = vmatpush1.msra.mxu0 %v461
  %1836 = vmatprep.subr.mxu0 %v466
  %1837 = vmatpush1.msra.mxu0 %v465
  %1838 = vmatprep.subr.mxu0 %v470
  %1839 = vmatpush1.msra.mxu0 %v469
  %1840 = vmatprep.subr.mxu0 0.0
  %1841 = vmatpush1.msra.mxu0 0.0
  %1842 = vmatprep.subr.mxu0 0.0
  %1843 = vmatpush1.msra.mxu0 0.0
  %1844 = vmatprep.subr.mxu0 0.0
  %1845 = vmatpush1.msra.mxu0 0.0
  %1846 = vmatprep.subr.mxu0 0.0
  %1847 = vmatpush1.msra.mxu0 0.0
  %1848 = vmatprep.subr.mxu0 0.0
  %1849 = vmatpush1.msra.mxu0 0.0
  %1850 = vmatprep.subr.mxu0 0.0
  %1851 = vmatpush1.msra.mxu0 0.0
  %1852 = vmatprep.subr.mxu0 0.0
  %1853 = vmatpush1.msra.mxu0 0.0
  %1854 = vmatprep.subr.mxu0 0.0
  %1855 = vmatpush1.msra.mxu0 0.0
  %1856 = vmatprep.subr.mxu0 0.0
  %1857 = vmatpush1.msra.mxu0 0.0
  %1858 = vmatprep.subr.mxu0 0.0
  %1859 = vmatpush1.msra.mxu0 0.0
  %1860 = vmatprep.subr.mxu0 0.0
  %1861 = vmatpush1.msra.mxu0 0.0
  %1862 = vmatprep.subr.mxu0 0.0
  %1863 = vmatpush1.msra.mxu0 0.0
  %1864 = vmatprep.subr.mxu0 0.0
  %1865 = vmatpush1.msra.mxu0 0.0
  %1866 = vmatprep.subr.mxu0 0.0
  %1867 = vmatpush1.msra.mxu0 0.0
  %1868 = vmatprep.subr.mxu0 0.0
  %1869 = vmatpush1.msra.mxu0 0.0
  %1870 = vmatprep.subr.mxu0 0.0
  %1871 = vmatpush1.msra.mxu0 0.0
  %1872 = vmatprep.mubr.f32.mxu0 0.0
  %1873 = vmatmul.mubr.f32.gmra.mrb[0].mxu0 %v1802
  %v1874 = vpop.f32.mrb[0].mxu0
  %v1875 = vadd.f32 %v1804, %v1874
  %v1876 = vpop.f32.mrb[0].mxu0
  %v1877 = vadd.f32 %v1805, %v1876
  %1878 = vdwg.mxu0
  %1879 = vmatprep.subr.mxu0 %v412
  %1880 = vmatpush1.msra.mxu0 %v411
  %1881 = vmatprep.subr.mxu0 %v416
  %1882 = vmatpush1.msra.mxu0 %v415
  %1883 = vmatprep.subr.mxu0 %v420
  %1884 = vmatpush1.msra.mxu0 %v419
  %1885 = vmatprep.subr.mxu0 %v424
  %1886 = vmatpush1.msra.mxu0 %v423
  %1887 = vmatprep.subr.mxu0 %v428
  %1888 = vmatpush1.msra.mxu0 %v427
  %1889 = vmatprep.subr.mxu0 %v432
  %1890 = vmatpush1.msra.mxu0 %v431
  %1891 = vmatprep.subr.mxu0 %v436
  %1892 = vmatpush1.msra.mxu0 %v435
  %1893 = vmatprep.subr.mxu0 %v440
  %1894 = vmatpush1.msra.mxu0 %v439
  %1895 = vmatprep.subr.mxu0 %v444
  %1896 = vmatpush1.msra.mxu0 %v443
  %1897 = vmatprep.subr.mxu0 %v448
  %1898 = vmatpush1.msra.mxu0 %v447
  %1899 = vmatprep.subr.mxu0 %v452
  %1900 = vmatpush1.msra.mxu0 %v451
  %1901 = vmatprep.subr.mxu0 %v456
  %1902 = vmatpush1.msra.mxu0 %v455
  %1903 = vmatprep.subr.mxu0 %v460
  %1904 = vmatpush1.msra.mxu0 %v459
  %1905 = vmatprep.subr.mxu0 %v464
  %1906 = vmatpush1.msra.mxu0 %v463
  %1907 = vmatprep.subr.mxu0 %v468
  %1908 = vmatpush1.msra.mxu0 %v467
  %1909 = vmatprep.subr.mxu0 %v472
  %1910 = vmatpush1.msra.mxu0 %v471
  %1911 = vmatprep.subr.mxu0 0.0
  %1912 = vmatpush1.msra.mxu0 0.0
  %1913 = vmatprep.subr.mxu0 0.0
  %1914 = vmatpush1.msra.mxu0 0.0
  %1915 = vmatprep.subr.mxu0 0.0
  %1916 = vmatpush1.msra.mxu0 0.0
  %1917 = vmatprep.subr.mxu0 0.0
  %1918 = vmatpush1.msra.mxu0 0.0
  %1919 = vmatprep.subr.mxu0 0.0
  %1920 = vmatpush1.msra.mxu0 0.0
  %1921 = vmatprep.subr.mxu0 0.0
  %1922 = vmatpush1.msra.mxu0 0.0
  %1923 = vmatprep.subr.mxu0 0.0
  %1924 = vmatpush1.msra.mxu0 0.0
  %1925 = vmatprep.subr.mxu0 0.0
  %1926 = vmatpush1.msra.mxu0 0.0
  %1927 = vmatprep.subr.mxu0 0.0
  %1928 = vmatpush1.msra.mxu0 0.0
  %1929 = vmatprep.subr.mxu0 0.0
  %1930 = vmatpush1.msra.mxu0 0.0
  %1931 = vmatprep.subr.mxu0 0.0
  %1932 = vmatpush1.msra.mxu0 0.0
  %1933 = vmatprep.subr.mxu0 0.0
  %1934 = vmatpush1.msra.mxu0 0.0
  %1935 = vmatprep.subr.mxu0 0.0
  %1936 = vmatpush1.msra.mxu0 0.0
  %1937 = vmatprep.subr.mxu0 0.0
  %1938 = vmatpush1.msra.mxu0 0.0
  %1939 = vmatprep.subr.mxu0 0.0
  %1940 = vmatpush1.msra.mxu0 0.0
  %1941 = vmatprep.subr.mxu0 0.0
  %1942 = vmatpush1.msra.mxu0 0.0
  %1943 = vmatprep.mubr.f32.mxu0 0.0
  %1944 = vmatmul.mubr.f32.gmra.mrb[0].mxu0 %v1802
  %v1945 = vpop.f32.mrb[0].mxu0
  %v1946 = vadd.f32 %v1806, %v1945
  %v1947 = vpop.f32.mrb[0].mxu0
  %v1948 = vadd.f32 %v1807, %v1947
  %1949 = vdwg.mxu0
  %v1950 = vxor.u32 %v1875, 2147483648
  %v1951 = vxor.u32 %v1877, 2147483648
  %v1952 = vmul.f32 %v1950, 1.442695
  %v1953 = vpow.pop %v1952
  %v1954 = vmul.f32 %v1951, 1.442695
  %v1955 = vpow.pop %v1954
  %v1956 = vadd.f32 %v1953, 1.0
  %v1957 = vadd.f32 %v1955, 1.0
  %v1958 = vrcp.pop %v1956
  %v1959 = vmul.f32 1.0, %v1958
  %v1960 = vrcp.pop %v1957
  %v1961 = vmul.f32 1.0, %v1960
  %v1962 = vmul.f32 %v1959, %v1946
  %v1963 = vadd.f32 %v1948, %v1962
  %v1964 = vtanh.pop %v1963
  %v1965 = vsub.f32 1.0, %v1961
  %v1966 = vmul.f32 %v1965, %v1964
  %v1967 = vmul.f32 %v1961, %v1802
  %v1968 = vadd.f32 %v1966, %v1967
  %1969 = vst [vmem:[#allocation3 + $0x38] sm:$0xff] %v1968
  %v1970 = vld [vmem:[#allocation3] sm:$0xff]
  %v1971 = vld [vmem:[#allocation3 + $0x8] sm:$0xff]
  %v1972 = vld [vmem:[#allocation3 + $0x10] sm:$0xff]
  %v1973 = vld [vmem:[#allocation3 + $0x18] sm:$0xff]
  %v1974 = vld [vmem:[#allocation3 + $0x20] sm:$0xff]
  %v1975 = vld [vmem:[#allocation3 + $0x28] sm:$0xff]
  %v1976 = vld [vmem:[#allocation3 + $0x30] sm:$0xff]
  %v1977 = vld [vmem:[#allocation3 + $0x38] sm:$0xff]
  %v1978 = vld [vmem:[%s3] sm:$0xff]
  %v1979 = vld [vmem:[%s3 + $0x8] sm:$0xff]
  %v1980 = vld [vmem:[%s3 + $0x10] sm:$0xff]
  %v1981 = vld [vmem:[%s3 + $0x18] sm:$0xff]
  %v1982 = vld [vmem:[%s3 + $0x20] sm:$0xff]
  %v1983 = vld [vmem:[%s3 + $0x28] sm:$0xff]
  %v1984 = vld [vmem:[%s3 + $0x30] sm:$0xff]
  %v1985 = vld [vmem:[%s3 + $0x38] sm:$0xff]
  %v1986 = vld [vmem:[%s3 + $0x40] sm:$0xff]
  %v1987 = vld [vmem:[%s3 + $0x48] sm:$0xff]
  %v1988 = vld [vmem:[%s3 + $0x50] sm:$0xff]
  %v1989 = vld [vmem:[%s3 + $0x58] sm:$0xff]
  %v1990 = vld [vmem:[%s3 + $0x60] sm:$0xff]
  %v1991 = vld [vmem:[%s3 + $0x68] sm:$0xff]
  %v1992 = vld [vmem:[%s3 + $0x70] sm:$0xff]
  %v1993 = vld [vmem:[%s3 + $0x78] sm:$0xff]
  %v1994 = vld [vmem:[%s4] sm:$0x1]
  %v1996 = vlaneseq
  %v1997 = vshrl.u32 %v1996, 7
  %v1998 = vsub.s32 0, %v1997
  %v1999 = vrot.slane %v1994, %v1998
  %2001 = vmatprep.subr.mxu0 0.0
  %2002 = vmatpush1.msra.mxu0 %v1978
  %2003 = vmatprep.subr.mxu0 0.0
  %2004 = vmatpush1.msra.mxu0 %v1979
  %2005 = vmatprep.subr.mxu0 0.0
  %2006 = vmatpush1.msra.mxu0 %v1980
  %2007 = vmatprep.subr.mxu0 0.0
  %2008 = vmatpush1.msra.mxu0 %v1981
  %2009 = vmatprep.subr.mxu0 0.0
  %2010 = vmatpush1.msra.mxu0 %v1982
  %2011 = vmatprep.subr.mxu0 0.0
  %2012 = vmatpush1.msra.mxu0 %v1983
  %2013 = vmatprep.subr.mxu0 0.0
  %2014 = vmatpush1.msra.mxu0 %v1984
  %2015 = vmatprep.subr.mxu0 0.0
  %2016 = vmatpush1.msra.mxu0 %v1985
  %2017 = vmatprep.subr.mxu0 0.0
  %2018 = vmatpush1.msra.mxu0 %v1986
  %2019 = vmatprep.subr.mxu0 0.0
  %2020 = vmatpush1.msra.mxu0 %v1987
  %2021 = vmatprep.subr.mxu0 0.0
  %2022 = vmatpush1.msra.mxu0 %v1988
  %2023 = vmatprep.subr.mxu0 0.0
  %2024 = vmatpush1.msra.mxu0 %v1989
  %2025 = vmatprep.subr.mxu0 0.0
  %2026 = vmatpush1.msra.mxu0 %v1990
  %2027 = vmatprep.subr.mxu0 0.0
  %2028 = vmatpush1.msra.mxu0 %v1991
  %2029 = vmatprep.subr.mxu0 0.0
  %2030 = vmatpush1.msra.mxu0 %v1992
  %2031 = vmatprep.subr.mxu0 0.0
  %2032 = vmatpush1.msra.mxu0 %v1993
  %2033 = vmatprep.subr.mxu0 0.0
  %2034 = vmatpush1.msra.mxu0 0.0
  %2035 = vmatprep.subr.mxu0 0.0
  %2036 = vmatpush1.msra.mxu0 0.0
  %2037 = vmatprep.subr.mxu0 0.0
  %2038 = vmatpush1.msra.mxu0 0.0
  %2039 = vmatprep.subr.mxu0 0.0
  %2040 = vmatpush1.msra.mxu0 0.0
  %2041 = vmatprep.subr.mxu0 0.0
  %2042 = vmatpush1.msra.mxu0 0.0
  %2043 = vmatprep.subr.mxu0 0.0
  %2044 = vmatpush1.msra.mxu0 0.0
  %2045 = vmatprep.subr.mxu0 0.0
  %2046 = vmatpush1.msra.mxu0 0.0
  %2047 = vmatprep.subr.mxu0 0.0
  %2048 = vmatpush1.msra.mxu0 0.0
  %2049 = vmatprep.subr.mxu0 0.0
  %2050 = vmatpush1.msra.mxu0 0.0
  %2051 = vmatprep.subr.mxu0 0.0
  %2052 = vmatpush1.msra.mxu0 0.0
  %2053 = vmatprep.subr.mxu0 0.0
  %2054 = vmatpush1.msra.mxu0 0.0
  %2055 = vmatprep.subr.mxu0 0.0
  %2056 = vmatpush1.msra.mxu0 0.0
  %2057 = vmatprep.subr.mxu0 0.0
  %2058 = vmatpush1.msra.mxu0 0.0
  %2059 = vmatprep.subr.mxu0 0.0
  %2060 = vmatpush1.msra.mxu0 0.0
  %2061 = vmatprep.subr.mxu0 0.0
  %2062 = vmatpush1.msra.mxu0 0.0
  %2063 = vmatprep.subr.mxu0 0.0
  %2064 = vmatpush1.msra.mxu0 0.0
  %2065 = vmatprep.mubr.f32.mxu0 0.0
  %2066 = vmatmul.mubr.f32.gmra.mrb[0].mxu0 %v1970
  %v2067 = vpop.f32.mrb[0].mxu0
  %v2068 = vadd.f32 %v1999, %v2067
  %v2069 = vpop.f32.mrb[0].mxu0
  %2070 = vmatprep.mubr.f32.mxu0 0.0
  %2071 = vmatmul.mubr.f32.gmra.mrb[0].mxu0 %v1971
  %v2072 = vpop.f32.mrb[0].mxu0
  %v2073 = vadd.f32 %v1999, %v2072
  %v2074 = vpop.f32.mrb[0].mxu0
  %2075 = vmatprep.mubr.f32.mxu0 0.0
  %2076 = vmatmul.mubr.f32.gmra.mrb[0].mxu0 %v1972
  %v2077 = vpop.f32.mrb[0].mxu0
  %v2078 = vadd.f32 %v1999, %v2077
  %v2079 = vpop.f32.mrb[0].mxu0
  %2080 = vmatprep.mubr.f32.mxu0 0.0
  %2081 = vmatmul.mubr.f32.gmra.mrb[0].mxu0 %v1973
  %v2082 = vpop.f32.mrb[0].mxu0
  %v2083 = vadd.f32 %v1999, %v2082
  %v2084 = vpop.f32.mrb[0].mxu0
  %2085 = vmatprep.mubr.f32.mxu0 0.0
  %2086 = vmatmul.mubr.f32.gmra.mrb[0].mxu0 %v1974
  %v2087 = vpop.f32.mrb[0].mxu0
  %v2088 = vadd.f32 %v1999, %v2087
  %v2089 = vpop.f32.mrb[0].mxu0
  %2090 = vmatprep.mubr.f32.mxu0 0.0
  %2091 = vmatmul.mubr.f32.gmra.mrb[0].mxu0 %v1975
  %v2092 = vpop.f32.mrb[0].mxu0
  %v2093 = vadd.f32 %v1999, %v2092
  %v2094 = vpop.f32.mrb[0].mxu0
  %2095 = vmatprep.mubr.f32.mxu0 0.0
  %2096 = vmatmul.mubr.f32.gmra.mrb[0].mxu0 %v1976
  %v2097 = vpop.f32.mrb[0].mxu0
  %v2098 = vadd.f32 %v1999, %v2097
  %v2099 = vpop.f32.mrb[0].mxu0
  %2100 = vmatprep.mubr.f32.mxu0 0.0
  %2101 = vmatmul.mubr.f32.gmra.mrb[0].mxu0 %v1977
  %v2102 = vpop.f32.mrb[0].mxu0
  %v2103 = vadd.f32 %v1999, %v2102
  %v2104 = vpop.f32.mrb[0].mxu0
  %2105 = vdwg.mxu0
  %v2106 = vld [vmem:[%s5] sm:$0xff]
  %v2107 = vld [vmem:[%s5 + $0x8] sm:$0xff]
  %v2108 = vld [vmem:[%s5 + $0x10] sm:$0xff]
  %vm2109 = vcmask 523264
  %v2111 = vsel %vm2109, %v2106, 0
  %v2114 = vsel %vm2109, %v2107, 0
  %v2117 = vsel %vm2109, %v2108, 0
  %2119 = vmatprep.subr.mxu0 0.0
  %2120 = vmatpush1.msra.mxu0 %v2068
  %2121 = vmatprep.subr.mxu0 0.0
  %2122 = vmatpush1.msra.mxu0 %v2073
  %2123 = vmatprep.subr.mxu0 0.0
  %2124 = vmatpush1.msra.mxu0 %v2078
  %2125 = vmatprep.subr.mxu0 0.0
  %2126 = vmatpush1.msra.mxu0 %v2083
  %2127 = vmatprep.subr.mxu0 0.0
  %2128 = vmatpush1.msra.mxu0 %v2088
  %2129 = vmatprep.subr.mxu0 0.0
  %2130 = vmatpush1.msra.mxu0 %v2093
  %2131 = vmatprep.subr.mxu0 0.0
  %2132 = vmatpush1.msra.mxu0 %v2098
  %2133 = vmatprep.subr.mxu0 0.0
  %2134 = vmatpush1.msra.mxu0 %v2103
  %2135 = vmatprep.subr.mxu0 0.0
  %2136 = vmatpush1.msra.mxu0 0.0
  %2137 = vmatprep.subr.mxu0 0.0
  %2138 = vmatpush1.msra.mxu0 0.0
  %2139 = vmatprep.subr.mxu0 0.0
  %2140 = vmatpush1.msra.mxu0 0.0
  %2141 = vmatprep.subr.mxu0 0.0
  %2142 = vmatpush1.msra.mxu0 0.0
  %2143 = vmatprep.subr.mxu0 0.0
  %2144 = vmatpush1.msra.mxu0 0.0
  %2145 = vmatprep.subr.mxu0 0.0
  %2146 = vmatpush1.msra.mxu0 0.0
  %2147 = vmatprep.subr.mxu0 0.0
  %2148 = vmatpush1.msra.mxu0 0.0
  %2149 = vmatprep.subr.mxu0 0.0
  %2150 = vmatpush1.msra.mxu0 0.0
  %2151 = vmatprep.subr.mxu0 0.0
  %2152 = vmatpush1.msra.mxu0 0.0
  %2153 = vmatprep.subr.mxu0 0.0
  %2154 = vmatpush1.msra.mxu0 0.0
  %2155 = vmatprep.subr.mxu0 0.0
  %2156 = vmatpush1.msra.mxu0 0.0
  %2157 = vmatprep.subr.mxu0 0.0
  %2158 = vmatpush1.msra.mxu0 0.0
  %2159 = vmatprep.subr.mxu0 0.0
  %2160 = vmatpush1.msra.mxu0 0.0
  %2161 = vmatprep.subr.mxu0 0.0
  %2162 = vmatpush1.msra.mxu0 0.0
  %2163 = vmatprep.subr.mxu0 0.0
  %2164 = vmatpush1.msra.mxu0 0.0
  %2165 = vmatprep.subr.mxu0 0.0
  %2166 = vmatpush1.msra.mxu0 0.0
  %2167 = vmatprep.subr.mxu0 0.0
  %2168 = vmatpush1.msra.mxu0 0.0
  %2169 = vmatprep.subr.mxu0 0.0
  %2170 = vmatpush1.msra.mxu0 0.0
  %2171 = vmatprep.subr.mxu0 0.0
  %2172 = vmatpush1.msra.mxu0 0.0
  %2173 = vmatprep.subr.mxu0 0.0
  %2174 = vmatpush1.msra.mxu0 0.0
  %2175 = vmatprep.subr.mxu0 0.0
  %2176 = vmatpush1.msra.mxu0 0.0
  %2177 = vmatprep.subr.mxu0 0.0
  %2178 = vmatpush1.msra.mxu0 0.0
  %2179 = vmatprep.subr.mxu0 0.0
  %2180 = vmatpush1.msra.mxu0 0.0
  %2181 = vmatprep.subr.mxu0 0.0
  %2182 = vmatpush1.msra.mxu0 0.0
  %2183 = vmatprep.mubr.f32.mxu0 0.0
  %2184 = vmatmul.mubr.f32.gmra.mrb[0].mxu0 %v2111
  %v2185 = vpop.f32.mrb[0].mxu0
  %v2186 = vadd.f32 0.0, %v2185
  %v2187 = vpop.f32.mrb[0].mxu0
  %2188 = vmatprep.mubr.f32.mxu0 0.0
  %2189 = vmatmul.mubr.f32.gmra.mrb[0].mxu0 %v2114
  %v2190 = vpop.f32.mrb[0].mxu0
  %v2191 = vadd.f32 0.0, %v2190
  %v2192 = vpop.f32.mrb[0].mxu0
  %2193 = vmatprep.mubr.f32.mxu0 0.0
  %2194 = vmatmul.mubr.f32.gmra.mrb[0].mxu0 %v2117
  %v2195 = vpop.f32.mrb[0].mxu0
  %v2196 = vadd.f32 0.0, %v2195
  %v2197 = vpop.f32.mrb[0].mxu0
  %2198 = vdwg.mxu0
  %v2199 = vld [vmem:[%s6] sm:$0xff]
  %v2200 = vld [vmem:[%s6 + $0x8] sm:$0xf]
  %2202 = vset.pattern.permute.xlu0 0
  %2203 = vperm.xlu0 %2202, %v2199
  %v2204 = vpop.permute.xlu0 %2203
  %2207 = vset.pattern.permute.xlu0 0
  %2208 = vperm.xlu0 %2207, %v2200
  %v2209 = vpop.permute.xlu0 %2208
  %v2211 = vadd.f32 %v2186, %v2204
  %v2212 = vadd.f32 %v2191, %v2209
  %vm2213 = vcmask 130048
  %2214 = vst.msk [vmem:[%s7] sm:$0xff] %vm2213, %v2211
  %vm2215 = vcmask 125952
  %2216 = vst.msk [vmem:[%s7 + $0x8] sm:$0xf] %vm2215, %v2212
  %vm2217 = vcmask 1043456
  %v2218 = vrot.slane %v2204, 4
  %v2219 = vrot.slane %v2209, 4
  %v2220 = vsel %vm2217, %v2218, %v2219
  %v2223 = vadd.f32 %v2191, %v2218
  %v2224 = vadd.f32 %v2196, %v2220
  %s2225 = scalar_lea.vmem %s7, 16
  %vm2226 = vcmask 130052
  %2227 = vst.msk [vmem:[%s2225 - $0x4] sm:$0xf0] %vm2226, %v2223
  %2228 = vst.msk [vmem:[%s2225 + $0x4] sm:$0xff] %vm2213, %v2224
  // Predicated region
  $region30: #{obfuscator_forward.1} parent=0 // pred_check
    _
  $region31: #{obfuscator_forward.1} parent=0 // pred_check_branch
    %2230 = sbr.rel (0) target = $region33
  $region32: #{obfuscator_forward.1} parent=0 // pred_region
    _
  $region33: #{obfuscator_forward.1} parent=0 // pred_fallthru
    _
  // Predicated region
  $region34: #{obfuscator_forward.1} parent=0 // pred_check
    _
  $region35: #{obfuscator_forward.1} parent=0 // pred_check_branch
    %2232 = sbr.rel (0) target = $region37
  $region36: #{obfuscator_forward.1} parent=0 // pred_region
    _
  $region37: #{obfuscator_forward.1} parent=0 // pred_fallthru
    _

</llo_original>
